<compile_context>
chip_gen: v7x
topology: tpu7x:2x2x1
jax: 0.10.0
libtpu: 0.0.40
codegen_flags: <defaults>
</compile_context>

<pallas_src>
import functools

import jax
import jax.numpy as jnp
from jax.experimental import pallas as pl
from jax.experimental.pallas import tpu as pltpu

EPS = 1e-5          # PyTorch InstanceNorm2d default
NEG_SLOPE = 0.2     # LeakyReLU negative slope
_MIB = 1024 * 1024


# --------------------------------------------------------------------------- #
# Kernels
# --------------------------------------------------------------------------- #

def _fused_kernel(x_ref, w_ref, fold_ref, foldt_ref, o_ref, *, inv_count):
    """Fused transpose-conv + InstanceNorm + LeakyReLU for one batch element.

    x_ref:     (1, HW, Cin)      input (native dtype, no upcast)
    w_ref:     (Cin, 4*Cout)     fused tap weights (col = (kh*2+kw)*Cout + co)
    fold_ref:  (4*Cout, Cout)    0/1 matrix folding the 4 taps per Cout
    foldt_ref: (Cout, 4*Cout)    its transpose (broadcast per-Cout -> columns)
    o_ref:     (1, HW, 4*Cout)   normalized + activated output
    """
    # One MXU matmul; the f32 result stays VMEM-resident for the whole step.
    y = jnp.dot(x_ref[0], w_ref[...], preferred_element_type=jnp.float32)

    # Instance-norm statistics (f32).  Tap folding / broadcast are tiny matmuls
    # with a 0/1 matrix, avoiding in-kernel lane reshapes.
    s = jnp.sum(y, axis=0, keepdims=True)                 # (1, 4*Cout)
    q = jnp.sum(y * y, axis=0, keepdims=True)             # (1, 4*Cout)
    s_c = jnp.dot(s, fold_ref[...], preferred_element_type=jnp.float32)  # (1, Cout)
    q_c = jnp.dot(q, fold_ref[...], preferred_element_type=jnp.float32)  # (1, Cout)
    mean = s_c * inv_count
    var = q_c * inv_count - mean * mean                   # biased var (InstanceNorm2d)
    inv = jax.lax.rsqrt(var + EPS)
    scale = jnp.dot(inv, foldt_ref[...], preferred_element_type=jnp.float32)
    shift = jnp.dot(mean * inv, foldt_ref[...], preferred_element_type=jnp.float32)

    # Normalize (single fused multiply-sub) + LeakyReLU(0.2), lane-dense store.
    yn = y * scale - shift
    o_ref[0] = jnp.where(yn >= 0, yn, NEG_SLOPE * yn).astype(o_ref.dtype)


def _conv_stats_kernel(x_ref, w_ref, y_ref, sum_ref, ssq_ref):
    """Two-pass fallback, pass 1: conv matmul + per-tile partial statistics.

    x_ref:   (1, THW, Cin)        input tile
    y_ref:   (1, THW, 4*Cout)     un-normalized conv output tile
    sum_ref: (1, 1, 1, 4*Cout) f32  per-tile column sums          (no accumulation
    ssq_ref: (1, 1, 1, 4*Cout) f32  per-tile column sum-squares    -> 'parallel')
    """
    y = jnp.dot(x_ref[0], w_ref[...], preferred_element_type=jnp.float32)
    y_ref[0] = y.astype(y_ref.dtype)
    sum_ref[0, 0] = jnp.sum(y, axis=0, keepdims=True)
    ssq_ref[0, 0] = jnp.sum(y * y, axis=0, keepdims=True)


def _norm_act_kernel(y_ref, scale_ref, shift_ref, o_ref):
    """Two-pass fallback, pass 2: y*scale - shift + LeakyReLU(0.2)."""
    y = y_ref[0].astype(jnp.float32)
    yn = y * scale_ref[0] - shift_ref[0]
    o_ref[0] = jnp.where(yn >= 0, yn, NEG_SLOPE * yn).astype(o_ref.dtype)


# --------------------------------------------------------------------------- #
# Sizing helpers
# --------------------------------------------------------------------------- #

def _round_up(a: int, b: int) -> int:
    return ((a + b - 1) // b) * b


def _vmem_capacity_bytes() -> int:
    """Per-core VMEM capacity; conservative v7x value if the query fails."""
    try:
        cap = int(getattr(pltpu.get_tpu_info(), "vmem_capacity_bytes"))
        if cap > 0:
            return cap
    except Exception:
        pass
    return 64 * _MIB


def _vmem_limit_bytes(footprint: int, cap: int) -> int:
    """Scoped-VMEM request: footprint + headroom, never near the physical cap."""
    return int(min(max(32 * _MIB, footprint + 8 * _MIB), int(cap * 0.8)))


def _pick_hw_tiling(hw_pad0: int, max_tile: int, align: int):
    """Return (tile, padded_hw): tile % align == 0 (or tile == padded_hw) and
    padded_hw % tile == 0.  Prefers an exact divisor; otherwise pads."""
    if hw_pad0 <= max_tile:
        return hw_pad0, hw_pad0
    best = None
    for t in range(max_tile, 0, -align):
        if hw_pad0 % t == 0:
            best = t
            break
    if best is not None and best * 2 >= max_tile:
        return best, hw_pad0
    # No reasonably large aligned divisor: pad HW up to a multiple of max_tile.
    return max_tile, _round_up(hw_pad0, max_tile)


# --------------------------------------------------------------------------- #
# Wrapper
# --------------------------------------------------------------------------- #

def transpose_conv_block(x_nchw: jax.Array, weight: jax.Array, *,
                         max_hw_tile: int = 2048,
                         matmul_dtype=None,
                         force_two_pass: bool = False) -> jax.Array:
    """x_nchw: (N, Cin, H, W); weight: (Cin, Cout, 2, 2) (PyTorch layout).

    Returns (N, Cout, 2H, 2W), matching the PyTorch module.

    matmul_dtype: optional cast for the matmul operands (e.g. jnp.bfloat16 on
    v5e where the deep, compute-bound layers pay several x for f32 MXU passes).
    """
    n, cin, h, w = x_nchw.shape
    cout = weight.shape[1]
    hw = h * w
    c4 = 4 * cout

    in_dtype = jnp.dtype(x_nchw.dtype)
    out_item = in_dtype.itemsize
    op_dtype = jnp.dtype(matmul_dtype) if matmul_dtype is not None else in_dtype
    x_item = op_dtype.itemsize
    # HBM intermediate (two-pass path only): bf16 when operands are f32.
    inter_dtype = jnp.dtype(jnp.bfloat16) if op_dtype == jnp.dtype(jnp.float32) else op_dtype
    inter_item = inter_dtype.itemsize

    # Layout glue: NCHW -> (N, HW, Cin); (Cin, Cout, kh, kw) -> (Cin, 4*Cout).
    x_flat = jnp.transpose(x_nchw, (0, 2, 3, 1)).reshape(n, hw, cin).astype(op_dtype)
    w_fused = jnp.transpose(weight, (0, 2, 3, 1)).reshape(cin, c4).astype(op_dtype)

    # Sublane alignment for the HW axis (second-minor dim of the blocks).
    align = 8 if x_item >= 4 else (16 if x_item == 2 else 32)
    hw_pad0 = _round_up(hw, align)

    cap = _vmem_capacity_bytes()
    inv_count = 1.0 / (4.0 * hw)        # true element count, independent of padding

    # ---------------- fused single-kernel path (y stays VMEM-resident) -------
    fused_bytes = (2 * hw_pad0 * cin * x_item        # x, double-buffered
                   + 2 * cin * c4 * x_item           # weight
                   + 4 * c4 * cout * 4               # fold + foldT
                   + 2 * hw_pad0 * c4 * out_item     # output, double-buffered
                   + 3 * hw_pad0 * c4 * 4            # f32 y + elementwise temps
                   + 2 * _MIB)
    use_fused = (not force_two_pass) and fused_bytes <= int(cap * 0.6)

    if use_fused:
        hw_pad = hw_pad0
        if hw_pad > hw:
            x_flat = jnp.pad(x_flat, ((0, 0), (0, hw_pad - hw), (0, 0)))
        fold = jnp.tile(jnp.eye(cout, dtype=jnp.float32), (4, 1))   # (4*Cout, Cout)
        foldt = jnp.transpose(fold)                                  # (Cout, 4*Cout)

        cost = pl.CostEstimate(
            flops=2 * n * hw_pad * cin * c4 + 8 * n * hw_pad * c4,
            transcendentals=n * cout,
            bytes_accessed=(n * hw_pad * cin * x_item + cin * c4 * x_item
                            + n * hw_pad * c4 * out_item + 8 * c4 * cout),
        )
        # TODO(synk): at N=1 the fused path runs on a single TensorCore on v7x;
        # a per-core HW split with a cross-core stats combine would recover it.
        out_flat = pl.pallas_call(
            functools.partial(_fused_kernel, inv_count=inv_count),
            out_shape=jax.ShapeDtypeStruct((n, hw_pad, c4), in_dtype),
            grid_spec=pltpu.PrefetchScalarGridSpec(
                num_scalar_prefetch=0,
                grid=(n,),
                in_specs=[
                    pl.BlockSpec((1, hw_pad, cin), lambda b: (b, 0, 0)),
                    pl.BlockSpec((cin, c4), lambda b: (0, 0)),
                    pl.BlockSpec((c4, cout), lambda b: (0, 0)),
                    pl.BlockSpec((cout, c4), lambda b: (0, 0)),
                ],
                out_specs=pl.BlockSpec((1, hw_pad, c4), lambda b: (b, 0, 0)),
            ),
            compiler_params=pltpu.CompilerParams(
                dimension_semantics=("parallel",),
                vmem_limit_bytes=_vmem_limit_bytes(fused_bytes, cap),
            ),
            cost_estimate=cost,
        )(x_flat, w_fused, fold, foldt)

    # ---------------- two-pass fallback (y round-trips HBM once) -------------
    else:
        two_pass_budget = min(int(cap * 0.4), 48 * _MIB)
        per_row = (2 * cin * x_item + 2 * c4 * inter_item
                   + 2 * c4 * out_item + 2 * c4 * 4)
        thw_cap = max(align, ((max(0, two_pass_budget - 4 * _MIB) // per_row)
                              // align) * align)
        max_tile = max(align, min((max_hw_tile // align) * align, thw_cap))
        thw, hw_pad = _pick_hw_tiling(hw_pad0, max_tile, align)
        n_tiles = hw_pad // thw
        if hw_pad > hw:
            x_flat = jnp.pad(x_flat, ((0, 0), (0, hw_pad - hw), (0, 0)))

        # -- pass 1: conv matmul + per-tile partial stats ----------------------
        step1_bytes = (2 * thw * cin * x_item + 2 * cin * c4 * x_item
                       + 2 * thw * c4 * inter_item + 2 * thw * c4 * 4
                       + 8 * c4 * 4 + 2 * _MIB)
        cost1 = pl.CostEstimate(
            flops=2 * n * hw_pad * cin * c4,
            transcendentals=0,
            bytes_accessed=(n * hw_pad * cin * x_item + cin * c4 * x_item
                            + n * hw_pad * c4 * inter_item
                            + 2 * n * n_tiles * c4 * 4),
        )
        y, col_sum, col_ssq = pl.pallas_call(
            _conv_stats_kernel,
            out_shape=(
                jax.ShapeDtypeStruct((n, hw_pad, c4), inter_dtype),
                jax.ShapeDtypeStruct((n, n_tiles, 1, c4), jnp.float32),
                jax.ShapeDtypeStruct((n, n_tiles, 1, c4), jnp.float32),
            ),
            grid_spec=pltpu.PrefetchScalarGridSpec(
                num_scalar_prefetch=0,
                grid=(n, n_tiles),
                in_specs=[
                    pl.BlockSpec((1, thw, cin), lambda b, t: (b, t, 0)),
                    pl.BlockSpec((cin, c4), lambda b, t: (0, 0)),
                ],
                out_specs=(
                    pl.BlockSpec((1, thw, c4), lambda b, t: (b, t, 0)),
                    pl.BlockSpec((1, 1, 1, c4), lambda b, t: (b, t, 0, 0)),
                    pl.BlockSpec((1, 1, 1, c4), lambda b, t: (b, t, 0, 0)),
                ),
            ),
            compiler_params=pltpu.CompilerParams(
                dimension_semantics=("parallel", "parallel"),
                vmem_limit_bytes=_vmem_limit_bytes(step1_bytes, cap),
            ),
            cost_estimate=cost1,
        )(x_flat, w_fused)

        # -- tiny per-(n, cout) stats fold + rsqrt in plain JAX ----------------
        s_c = col_sum.sum(axis=(1, 2)).reshape(n, 4, cout).sum(axis=1)   # (N, Cout)
        q_c = col_ssq.sum(axis=(1, 2)).reshape(n, 4, cout).sum(axis=1)
        mean = s_c * inv_count
        var = q_c * inv_count - mean * mean                # biased variance
        inv = jax.lax.rsqrt(var + EPS)
        scale_cols = jnp.tile(inv, (1, 4)).reshape(n, 1, c4)             # tap-major
        shift_cols = jnp.tile(mean * inv, (1, 4)).reshape(n, 1, c4)

        # -- pass 2: normalize + LeakyReLU (in place when dtypes match) --------
        step2_bytes = (2 * thw * c4 * inter_item + 2 * thw * c4 * out_item
                       + 2 * thw * c4 * 4 + 8 * c4 * 4 + 2 * _MIB)
        cost2 = pl.CostEstimate(
            flops=3 * n * hw_pad * c4,
            transcendentals=0,
            bytes_accessed=n * hw_pad * c4 * (inter_item + out_item) + 2 * n * c4 * 4,
        )
        aliases = {0: 0} if inter_dtype == in_dtype else {}
        out_flat = pl.pallas_call(
            _norm_act_kernel,
            out_shape=jax.ShapeDtypeStruct((n, hw_pad, c4), in_dtype),
            grid_spec=pltpu.PrefetchScalarGridSpec(
                num_scalar_prefetch=0,
                grid=(n, n_tiles),
                in_specs=[
                    pl.BlockSpec((1, thw, c4), lambda b, t: (b, t, 0)),
                    pl.BlockSpec((1, 1, c4), lambda b, t: (b, 0, 0)),
                    pl.BlockSpec((1, 1, c4), lambda b, t: (b, 0, 0)),
                ],
                out_specs=pl.BlockSpec((1, thw, c4), lambda b, t: (b, t, 0)),
            ),
            compiler_params=pltpu.CompilerParams(
                dimension_semantics=("parallel", "parallel"),
                vmem_limit_bytes=_vmem_limit_bytes(step2_bytes, cap),
            ),
            cost_estimate=cost2,
            input_output_aliases=aliases,
        )(y, scale_cols, shift_cols)
        hw_pad = hw_pad  # (for the shared epilogue below)

    # Layout glue: (N, HW, 4*Cout) with cols (kh, kw, co) -> (N, Cout, 2H, 2W).
    if out_flat.shape[1] > hw:
        out_flat = out_flat[:, :hw, :]
    out = out_flat.reshape(n, h, w, 2, 2, cout)            # (n, h, w, kh, kw, co)
    out = jnp.transpose(out, (0, 5, 1, 3, 2, 4))           # (n, co, h, kh, w, kw)
    return out.reshape(n, cout, 2 * h, 2 * w)


# --------------------------------------------------------------------------- #
# Reference + test
# --------------------------------------------------------------------------- #

def _reference(x_nchw, weight):
    """Pure-JAX reference matching PyTorch semantics (f32 math)."""
    n, cin, h, w = x_nchw.shape
    cout = weight.shape[1]
    y = jnp.einsum("nihw,iokl->nohkwl", x_nchw, weight)
    y = y.reshape(n, cout, 2 * h, 2 * w)
    mean = jnp.mean(y, axis=(2, 3), keepdims=True)
    var = jnp.mean((y - mean) ** 2, axis=(2, 3), keepdims=True)
    yn = (y - mean) * jax.lax.rsqrt(var + EPS)
    return jnp.where(yn >= 0, yn, NEG_SLOPE * yn)


if __name__ == "__main__":
    key = jax.random.PRNGKey(0)
    k_x, k_w = jax.random.split(key)

    N, Cin, Cout, H, W = 2, 4, 8, 16, 16
    x = jax.random.normal(k_x, (N, Cin, H, W), dtype=jnp.float32)
    # Deterministic synthetic ConvTranspose2d weight (PyTorch shape: Cin, Cout, 2, 2)
    weight = jax.random.normal(k_w, (Cin, Cout, 2, 2), dtype=jnp.float32) * 0.1

    ref = _reference(x, weight)

    # 1) fused single-kernel path (default at these shapes; y never leaves VMEM)
    fused_fn = jax.jit(lambda a, b: transpose_conv_block(a, b))
    out = jax.block_until_ready(fused_fn(x, weight))
    assert out.shape == (N, Cout, 2 * H, 2 * W), out.shape
    assert jnp.allclose(out, ref, atol=1e-4, rtol=1e-4), \
        float(jnp.max(jnp.abs(out - ref)))

    # 2) two-pass fallback, forced: bf16 HBM intermediate, 4 HW tiles,
    #    per-tile partial stats (both grid axes parallel).
    two_pass_fn = jax.jit(
        lambda a, b: transpose_conv_block(a, b, max_hw_tile=64, force_two_pass=True))
    out2 = jax.block_until_ready(two_pass_fn(x, weight))
    assert jnp.allclose(out2, ref, atol=3e-2, rtol=3e-2), \
        float(jnp.max(jnp.abs(out2 - ref)))

    # 3) bf16 input, two-pass fallback: exercises the in-place
    #    (input_output_aliases) path and bf16 sublane alignment.
    xb = x.astype(jnp.bfloat16)
    wb = weight.astype(jnp.bfloat16)
    ref_b = _reference(xb.astype(jnp.float32), wb.astype(jnp.float32))
    bf16_fn = jax.jit(
        lambda a, b: transpose_conv_block(a, b, max_hw_tile=64, force_two_pass=True))
    out3 = jax.block_until_ready(bf16_fn(xb, wb)).astype(jnp.float32)
    assert jnp.allclose(out3, ref_b, atol=1e-1, rtol=5e-2), \
        float(jnp.max(jnp.abs(out3 - ref_b)))

    print("KERNEL_OK")
</pallas_src>

<mosaic_0001>
module attributes {stable_mosaic.version = 11 : i64} {
  func.func @_fused_kernel(%arg0: i32, %arg1: memref<1x256x4xf32, #tpu.memory_space<vmem>>, %arg2: memref<4x32xf32, #tpu.memory_space<vmem>>, %arg3: memref<32x8xf32, #tpu.memory_space<vmem>>, %arg4: memref<8x32xf32, #tpu.memory_space<vmem>>, %arg5: memref<1x256x32xf32, #tpu.memory_space<vmem>>) attributes {dimension_semantics = [#tpu.dimension_semantics<parallel>], iteration_bounds = array<i64: 2>, scalar_prefetch = 0 : i64, scratch_operands = 0 : i64, tpu.core_type = #tpu.core_type<tc>, window_params = [{transform_indices = @transform_0, window_bounds = array<i64: 1, 256, 4>}, {pipeline_mode = #tpu.pipeline_mode<synchronous>, transform_indices = @transform_1, window_bounds = array<i64: 4, 32>}, {pipeline_mode = #tpu.pipeline_mode<synchronous>, transform_indices = @transform_2, window_bounds = array<i64: 32, 8>}, {pipeline_mode = #tpu.pipeline_mode<synchronous>, transform_indices = @transform_3, window_bounds = array<i64: 8, 32>}, {transform_indices = @transform_4, window_bounds = array<i64: 1, 256, 32>}]} {
    %c0 = arith.constant 0 : index
    %c0_0 = arith.constant 0 : index
    %c0_1 = arith.constant 0 : index
    %0 = vector.load %arg1[%c0, %c0_0, %c0_1] : memref<1x256x4xf32, #tpu.memory_space<vmem>>, vector<1x256x4xf32>
    %1 = vector.shape_cast %0 : vector<1x256x4xf32> to vector<256x4xf32>
    %c0_2 = arith.constant 0 : index
    %c0_3 = arith.constant 0 : index
    %2 = vector.load %arg2[%c0_2, %c0_3] : memref<4x32xf32, #tpu.memory_space<vmem>>, vector<4x32xf32>
    %cst = arith.constant dense<0.000000e+00> : vector<256x32xf32>
    %3 = tpu.matmul %1, %2, %cst {dimension_numbers = #tpu.dot_dimension_numbers<[1], [0], [0], [1], [0, 0, 1, 1], [], []>} : vector<256x4xf32>, vector<4x32xf32>, vector<256x32xf32> -> vector<256x32xf32>
    %cst_4 = arith.constant dense<0.000000e+00> : vector<32xf32>
    %4 = vector.multi_reduction <add>, %3, %cst_4 [0] : vector<256x32xf32> to vector<32xf32>
    %5 = vector.shape_cast %4 : vector<32xf32> to vector<1x32xf32>
    %6 = arith.mulf %3, %3 : vector<256x32xf32>
    %cst_5 = arith.constant dense<0.000000e+00> : vector<32xf32>
    %7 = vector.multi_reduction <add>, %6, %cst_5 [0] : vector<256x32xf32> to vector<32xf32>
    %8 = vector.shape_cast %7 : vector<32xf32> to vector<1x32xf32>
    %c0_6 = arith.constant 0 : index
    %c0_7 = arith.constant 0 : index
    %9 = vector.load %arg3[%c0_6, %c0_7] : memref<32x8xf32, #tpu.memory_space<vmem>>, vector<32x8xf32>
    %cst_8 = arith.constant dense<0.000000e+00> : vector<1x8xf32>
    %10 = tpu.matmul %5, %9, %cst_8 {dimension_numbers = #tpu.dot_dimension_numbers<[1], [0], [0], [1], [0, 0, 1, 1], [], []>} : vector<1x32xf32>, vector<32x8xf32>, vector<1x8xf32> -> vector<1x8xf32>
    %c0_9 = arith.constant 0 : index
    %c0_10 = arith.constant 0 : index
    %11 = vector.load %arg3[%c0_9, %c0_10] : memref<32x8xf32, #tpu.memory_space<vmem>>, vector<32x8xf32>
    %cst_11 = arith.constant dense<0.000000e+00> : vector<1x8xf32>
    %12 = tpu.matmul %8, %11, %cst_11 {dimension_numbers = #tpu.dot_dimension_numbers<[1], [0], [0], [1], [0, 0, 1, 1], [], []>} : vector<1x32xf32>, vector<32x8xf32>, vector<1x8xf32> -> vector<1x8xf32>
    %cst_12 = arith.constant 9.765625E-4 : f32
    %13 = vector.broadcast %cst_12 : f32 to vector<1x8xf32>
    %14 = arith.mulf %10, %13 : vector<1x8xf32>
    %cst_13 = arith.constant 9.765625E-4 : f32
    %15 = vector.broadcast %cst_13 : f32 to vector<1x8xf32>
    %16 = arith.mulf %12, %15 : vector<1x8xf32>
    %17 = arith.mulf %14, %14 : vector<1x8xf32>
    %18 = arith.subf %16, %17 : vector<1x8xf32>
    %cst_14 = arith.constant 9.99999974E-6 : f32
    %19 = vector.broadcast %cst_14 : f32 to vector<1x8xf32>
    %20 = arith.addf %18, %19 : vector<1x8xf32>
    %21 = math.rsqrt %20 : vector<1x8xf32>
    %c0_15 = arith.constant 0 : index
    %c0_16 = arith.constant 0 : index
    %22 = vector.load %arg4[%c0_15, %c0_16] : memref<8x32xf32, #tpu.memory_space<vmem>>, vector<8x32xf32>
    %cst_17 = arith.constant dense<0.000000e+00> : vector<1x32xf32>
    %23 = tpu.matmul %21, %22, %cst_17 {dimension_numbers = #tpu.dot_dimension_numbers<[1], [0], [0], [1], [0, 0, 1, 1], [], []>} : vector<1x8xf32>, vector<8x32xf32>, vector<1x32xf32> -> vector<1x32xf32>
    %24 = arith.mulf %14, %21 : vector<1x8xf32>
    %c0_18 = arith.constant 0 : index
    %c0_19 = arith.constant 0 : index
    %25 = vector.load %arg4[%c0_18, %c0_19] : memref<8x32xf32, #tpu.memory_space<vmem>>, vector<8x32xf32>
    %cst_20 = arith.constant dense<0.000000e+00> : vector<1x32xf32>
    %26 = tpu.matmul %24, %25, %cst_20 {dimension_numbers = #tpu.dot_dimension_numbers<[1], [0], [0], [1], [0, 0, 1, 1], [], []>} : vector<1x8xf32>, vector<8x32xf32>, vector<1x32xf32> -> vector<1x32xf32>
    %27 = vector.broadcast %23 : vector<1x32xf32> to vector<256x32xf32>
    %28 = arith.mulf %3, %27 : vector<256x32xf32>
    %29 = vector.broadcast %26 : vector<1x32xf32> to vector<256x32xf32>
    %30 = arith.subf %28, %29 : vector<256x32xf32>
    %cst_21 = arith.constant 0.000000e+00 : f32
    %31 = vector.broadcast %cst_21 : f32 to vector<256x32xf32>
    %32 = arith.cmpf oge, %30, %31 : vector<256x32xf32>
    %cst_22 = arith.constant 2.000000e-01 : f32
    %33 = vector.broadcast %cst_22 : f32 to vector<256x32xf32>
    %34 = arith.mulf %33, %30 : vector<256x32xf32>
    %35 = arith.select %32, %30, %34 : vector<256x32xi1>, vector<256x32xf32>
    %c0_23 = arith.constant 0 : index
    %c0_24 = arith.constant 0 : index
    %c0_25 = arith.constant 0 : index
    %36 = vector.load %arg5[%c0_23, %c0_24, %c0_25] : memref<1x256x32xf32, #tpu.memory_space<vmem>>, vector<1x256x32xf32>
    %37 = vector.shape_cast %36 : vector<1x256x32xf32> to vector<256x32xf32>
    %38 = vector.shape_cast %35 : vector<256x32xf32> to vector<1x256x32xf32>
    tpu.vector_store %arg5[%c0_23, %c0_24, %c0_25], %38 {strides = array<i32>} : memref<1x256x32xf32, #tpu.memory_space<vmem>>, vector<1x256x32xf32>,
    return
  }
  func.func @transform_0(%arg0: i32) -> (i32, i32, i32) {
    %c0_i32 = arith.constant 0 : i32
    %c0_i32_0 = arith.constant 0 : i32
    %c0_i32_1 = arith.constant 0 : i32
    return %arg0, %c0_i32, %c0_i32_0 : i32, i32, i32
  }
  func.func @transform_1(%arg0: i32) -> (i32, i32) {
    %c0_i32 = arith.constant 0 : i32
    %c0_i32_0 = arith.constant 0 : i32
    %c0_i32_1 = arith.constant 0 : i32
    return %c0_i32, %c0_i32_0 : i32, i32
  }
  func.func @transform_2(%arg0: i32) -> (i32, i32) {
    %c0_i32 = arith.constant 0 : i32
    %c0_i32_0 = arith.constant 0 : i32
    %c0_i32_1 = arith.constant 0 : i32
    return %c0_i32, %c0_i32_0 : i32, i32
  }
  func.func @transform_3(%arg0: i32) -> (i32, i32) {
    %c0_i32 = arith.constant 0 : i32
    %c0_i32_0 = arith.constant 0 : i32
    %c0_i32_1 = arith.constant 0 : i32
    return %c0_i32, %c0_i32_0 : i32, i32
  }
  func.func @transform_4(%arg0: i32) -> (i32, i32, i32) {
    %c0_i32 = arith.constant 0 : i32
    %c0_i32_0 = arith.constant 0 : i32
    %c0_i32_1 = arith.constant 0 : i32
    return %arg0, %c0_i32, %c0_i32_0 : i32, i32, i32
  }
}

</mosaic_0001>

<llo_original>
// kernel: tile.9
$region0: #{tile.9}
  %s0 = inlined_call_operand.vmem [shape: f32[4,8,8], index: 0, kind: input, shape index: {}]
  %s1 = inlined_call_operand.vmem [shape: f32[32,8], index: 1, kind: output, shape index: {}]
  $region1: #{tile.9} parent=0
    #allocation0 [shape = 'u8[32768]{0}', space=vmem, size = 0x8000, scoped, tag = 'scoped mem for input reshape']
    %s3 = sshllo.u32 0, 4
    %s4 = smul.addr 4, 7
    %s5 = scalar_lea.vmem %s0, %s4
    %v6 = vld [vmem:[%s5] sm:%s3]
    %s7 = scalar_lea.vmem [#allocation0], 56
    %8 = vst [vmem:[%s7] sm:%s3] %v6
    %s9 = smul.addr 4, 6
    %s10 = scalar_lea.vmem %s0, %s9
    %v11 = vld [vmem:[%s10] sm:%s3]
    %s12 = scalar_lea.vmem [#allocation0], 48
    %13 = vst [vmem:[%s12] sm:%s3] %v11
    %s14 = smul.addr 4, 5
    %s15 = scalar_lea.vmem %s0, %s14
    %v16 = vld [vmem:[%s15] sm:%s3]
    %s17 = scalar_lea.vmem [#allocation0], 40
    %18 = vst [vmem:[%s17] sm:%s3] %v16
    %s19 = smul.addr 4, 4
    %s20 = scalar_lea.vmem %s0, %s19
    %v21 = vld [vmem:[%s20] sm:%s3]
    %s22 = scalar_lea.vmem [#allocation0], 32
    %23 = vst [vmem:[%s22] sm:%s3] %v21
    %s24 = smul.addr 4, 3
    %s25 = scalar_lea.vmem %s0, %s24
    %v26 = vld [vmem:[%s25] sm:%s3]
    %s27 = scalar_lea.vmem [#allocation0], 24
    %28 = vst [vmem:[%s27] sm:%s3] %v26
    %s29 = smul.addr 4, 2
    %s30 = scalar_lea.vmem %s0, %s29
    %v31 = vld [vmem:[%s30] sm:%s3]
    %s32 = scalar_lea.vmem [#allocation0], 16
    %33 = vst [vmem:[%s32] sm:%s3] %v31
    %s34 = scalar_lea.vmem %s0, 4
    %v35 = vld [vmem:[%s34] sm:%s3]
    %s36 = scalar_lea.vmem [#allocation0], 8
    %37 = vst [vmem:[%s36] sm:%s3] %v35
    %v38 = vld [vmem:[%s0] sm:%s3]
    %39 = vst [vmem:[#allocation0] sm:%s3] %v38
    %v40 = vld [vmem:[#allocation0] ss:$8 sm:$0xf]
    %v41 = vld [vmem:[#allocation0] ss:$8 sm:$0xf0]
    %vm42 = vcmask 1047556
    %v43 = vsel %vm42, %v41, %v40
    %vm44 = vcmask 64512
    %45 = vst.msk [vmem:[%s1] sm:$0xff] %vm44, %v43
    %s46 = scalar_lea.vmem [#allocation0], 3
    %v47 = vld [vmem:[%s46] ss:$8 sm:$0xf]
    %s48 = scalar_lea.vmem [#allocation0], 3
    %v49 = vld [vmem:[%s48] ss:$8 sm:$0xf0]
    %vm50 = vcmask 1047556
    %v51 = vsel %vm50, %v49, %v47
    %52 = vrot.lane.b32.xlu0 %v51, 24
    %v53 = vpop.permute.xlu0 %52
    %vm54 = vcmask 261312
    %55 = vst.msk [vmem:[%s1] sm:$0xff] %vm54, %v53
    %s56 = scalar_lea.vmem [#allocation0], 2
    %v57 = vld [vmem:[%s56] ss:$8 sm:$0xf]
    %s58 = scalar_lea.vmem [#allocation0], 2
    %v59 = vld [vmem:[%s58] ss:$8 sm:$0xf0]
    %vm60 = vcmask 1047556
    %v61 = vsel %vm60, %v59, %v57
    %62 = vrot.lane.b32.xlu0 %v61, 16
    %v63 = vpop.permute.xlu0 %62
    %vm64 = vcmask 195712
    %65 = vst.msk [vmem:[%s1] sm:$0xff] %vm64, %v63
    %s66 = scalar_lea.vmem [#allocation0], 1
    %v67 = vld [vmem:[%s66] ss:$8 sm:$0xf]
    %s68 = scalar_lea.vmem [#allocation0], 1
    %v69 = vld [vmem:[%s68] ss:$8 sm:$0xf0]
    %vm70 = vcmask 1047556
    %v71 = vsel %vm70, %v69, %v67
    %72 = vrot.lane.b32.xlu0 %v71, 8
    %v73 = vpop.permute.xlu0 %72
    %vm74 = vcmask 130112
    %75 = vst.msk [vmem:[%s1] sm:$0xff] %vm74, %v73

// kernel: _lambda_.1
$region0: #{_lambda_.1}
  #allocation0 [shape = 'u32[]', space=smem, size = 0x4, offset = 0x4, fixed_abs, tag = 'smem constant byte address 0x4 - core index']
  #allocation1 [shape = 'u32[144,128]{1,0:T(1,128)}', space=vmem, size = 0x12000, scoped, tag = 'internal scratch']
  %s0 = inlined_call_operand.vmem [shape: f32[2,256,4], index: 0, kind: input, shape index: {}]
  %s1 = inlined_call_operand.vmem [shape: f32[4,32], index: 1, kind: input, shape index: {}]
  %s2 = inlined_call_operand.vmem [shape: f32[32,8], index: 2, kind: input, shape index: {}]
  %s3 = inlined_call_operand.vmem [shape: f32[8,32], index: 3, kind: input, shape index: {}]
  %s4 = inlined_call_operand.vmem [shape: f32[2,256,32], index: 4, kind: output, shape index: {}]
  %s5 = sld [smem:[#allocation0]]
  $region49: #{_lambda_.1} parent=0
    _
  %s7 = ssub.s32 1, %s5
  %s8 = scalar_select 0, %s7, %s5
  loop: start=0, step=1, limit=4
  $region2: #{_lambda_.1} parent=0 // loop_pre_header
    _
  $region3: #{_lambda_.1} parent=0 // loop_header
    %s10 = sphi 0, %s14
    %p11 = scmp.ge.s32.totalorder %s10, 4
    %s20 = sphi 0, %s22
    %s23 = sphi 0, %s20
    %s24 = sphi 0, %s23
    %s40 = sphi 0, %s24
    %s44 = sphi 0, %s44
    %s46 = sphi 0, %s44
    %s47 = sphi 0, %s46
    %s61 = sphi 0, %s47
    %s65 = sphi 0, %s65
    %s67 = sphi 0, %s65
    %s68 = sphi 0, %s67
    %s82 = sphi 0, %s68
    %s86 = sphi 0, %s86
    %s88 = sphi 0, %s86
    %s89 = sphi 0, %s88
    %s103 = sphi 0, %s89
    %s109 = sphi 0, %s111
    %s112 = sphi 0, %s109
    %s113 = sphi 0, %s112
    %s129 = sphi 0, %s113
  $region4: #{_lambda_.1} parent=0 // loop_header_branch
    %13 = sbr.rel (%p11) target = $region8
  $region5: #{_lambda_.1} parent=0 // loop_body
    %s15 = ssub.s32 %s10, 1
    %s16 = ssub.s32 %s10, 2
    %s17 = sadd.s32 %s10, 1
    %s18 = ssub.s32 %s10, %s17
    %p19 = scmp.eq.s32.totalorder %s18, 0
    %s21 = sadd.s32 %s20, 1
    %s22 = scalar_select %p19, %s20, %s21
    %p25 = pneg %p19
    %p26 = scmp.eq.s32.totalorder %s10, 1
    %p27 = por %p25, %p26
    %p28 = scmp.ne.s32.totalorder %s20, %s23
    %p29 = scmp.eq.s32.totalorder %s10, 0
    %p30 = por %p28, %p29
    %p31 = scmp.ne.s32.totalorder %s20, %s23
    %p32 = scmp.eq.s32.totalorder %s15, 1
    %p33 = por %p31, %p32
    %p34 = scmp.ne.s32.totalorder %s23, %s24
    %p35 = scmp.eq.s32.totalorder %s15, 0
    %p36 = por %p34, %p35
    %p37 = scmp.ne.s32.totalorder %s23, %s24
    %p38 = scmp.eq.s32.totalorder %s16, 1
    %p39 = por %p37, %p38
    %p41 = scmp.ne.s32.totalorder %s24, %s40
    %p42 = scmp.eq.s32.totalorder %s16, 0
    %p43 = por %p41, %p42
    %s45 = sadd.s32 %s44, 1
    %p48 = scmp.eq.s32.totalorder %s10, 1
    %p49 = scmp.ne.s32.totalorder %s44, %s46
    %p50 = scmp.eq.s32.totalorder %s10, 0
    %p51 = por %p49, %p50
    %p52 = scmp.ne.s32.totalorder %s44, %s46
    %p53 = scmp.eq.s32.totalorder %s15, 1
    %p54 = por %p52, %p53
    %p55 = scmp.ne.s32.totalorder %s46, %s47
    %p56 = scmp.eq.s32.totalorder %s15, 0
    %p57 = por %p55, %p56
    %p58 = scmp.ne.s32.totalorder %s46, %s47
    %p59 = scmp.eq.s32.totalorder %s16, 1
    %p60 = por %p58, %p59
    %p62 = scmp.ne.s32.totalorder %s47, %s61
    %p63 = scmp.eq.s32.totalorder %s16, 0
    %p64 = por %p62, %p63
    %s66 = sadd.s32 %s65, 1
    %p69 = scmp.eq.s32.totalorder %s10, 1
    %p70 = scmp.ne.s32.totalorder %s65, %s67
    %p71 = scmp.eq.s32.totalorder %s10, 0
    %p72 = por %p70, %p71
    %p73 = scmp.ne.s32.totalorder %s65, %s67
    %p74 = scmp.eq.s32.totalorder %s15, 1
    %p75 = por %p73, %p74
    %p76 = scmp.ne.s32.totalorder %s67, %s68
    %p77 = scmp.eq.s32.totalorder %s15, 0
    %p78 = por %p76, %p77
    %p79 = scmp.ne.s32.totalorder %s67, %s68
    %p80 = scmp.eq.s32.totalorder %s16, 1
    %p81 = por %p79, %p80
    %p83 = scmp.ne.s32.totalorder %s68, %s82
    %p84 = scmp.eq.s32.totalorder %s16, 0
    %p85 = por %p83, %p84
    %s87 = sadd.s32 %s86, 1
    %p90 = scmp.eq.s32.totalorder %s10, 1
    %p91 = scmp.ne.s32.totalorder %s86, %s88
    %p92 = scmp.eq.s32.totalorder %s10, 0
    %p93 = por %p91, %p92
    %p94 = scmp.ne.s32.totalorder %s86, %s88
    %p95 = scmp.eq.s32.totalorder %s15, 1
    %p96 = por %p94, %p95
    %p97 = scmp.ne.s32.totalorder %s88, %s89
    %p98 = scmp.eq.s32.totalorder %s15, 0
    %p99 = por %p97, %p98
    %p100 = scmp.ne.s32.totalorder %s88, %s89
    %p101 = scmp.eq.s32.totalorder %s16, 1
    %p102 = por %p100, %p101
    %p104 = scmp.ne.s32.totalorder %s89, %s103
    %p105 = scmp.eq.s32.totalorder %s16, 0
    %p106 = por %p104, %p105
    %s107 = ssub.s32 %s10, %s17
    %p108 = scmp.eq.s32.totalorder %s107, 0
    %s110 = sadd.s32 %s109, 1
    %s111 = scalar_select %p108, %s109, %s110
    %p114 = pneg %p108
    %p115 = scmp.eq.s32.totalorder %s10, 1
    %p116 = por %p114, %p115
    %p117 = scmp.ne.s32.totalorder %s109, %s112
    %p118 = scmp.eq.s32.totalorder %s10, 0
    %p119 = por %p117, %p118
    %p120 = scmp.ne.s32.totalorder %s109, %s112
    %p121 = scmp.eq.s32.totalorder %s15, 1
    %p122 = por %p120, %p121
    %p123 = scmp.ne.s32.totalorder %s112, %s113
    %p124 = scmp.eq.s32.totalorder %s15, 0
    %p125 = por %p123, %p124
    %p126 = scmp.ne.s32.totalorder %s112, %s113
    %p127 = scmp.eq.s32.totalorder %s16, 1
    %p128 = por %p126, %p127
    %p130 = scmp.ne.s32.totalorder %s113, %s129
    %p131 = scmp.eq.s32.totalorder %s16, 0
    %p132 = por %p130, %p131
    %p133 = scmp.le.s32.totalorder 1, %s10
    %p134 = scmp.lt.s32.totalorder %s10, 3
    %p135 = pnand %p133, %p134
    %p136 = pneg %p135
    // Predicated region
    $region9: #{_lambda_.1} parent=5 // pred_check
      _
    $region10: #{_lambda_.1} parent=5 // pred_check_branch
      %138 = sbr.rel (%p135) target = $region12
    $region11: #{_lambda_.1} parent=5 // pred_region
      %s139 = ssub.s32 %s10, 1
      // Predicated region
      $region13: #{_lambda_.1} parent=11 // pred_check
        %p140 = pneg %p57
      $region14: #{_lambda_.1} parent=11 // pred_check_branch
        %142 = sbr.rel (%p140) target = $region16
      $region15: #{_lambda_.1} parent=11 // pred_region
        _
      $region16: #{_lambda_.1} parent=11 // pred_fallthru
        _
      // Predicated region
      $region17: #{_lambda_.1} parent=11 // pred_check
        %p143 = pneg %p78
      $region18: #{_lambda_.1} parent=11 // pred_check_branch
        %145 = sbr.rel (%p143) target = $region20
      $region19: #{_lambda_.1} parent=11 // pred_region
        _
      $region20: #{_lambda_.1} parent=11 // pred_fallthru
        _
      // Predicated region
      $region21: #{_lambda_.1} parent=11 // pred_check
        %p146 = pneg %p99
      $region22: #{_lambda_.1} parent=11 // pred_check_branch
        %148 = sbr.rel (%p146) target = $region24
      $region23: #{_lambda_.1} parent=11 // pred_region
        _
      $region24: #{_lambda_.1} parent=11 // pred_fallthru
        _
    $region12: #{_lambda_.1} parent=5 // pred_fallthru
      _
    %p149 = scmp.lt.s32.totalorder %s10, 2
    // Predicated region
    $region25: #{_lambda_.1} parent=5 // pred_check
      %p150 = pneg %p149
    $region26: #{_lambda_.1} parent=5 // pred_check_branch
      %152 = sbr.rel (%p150) target = $region28
    $region27: #{_lambda_.1} parent=5 // pred_region
      // Predicated region
      $region29: #{_lambda_.1} parent=27 // pred_check
        %p153 = pneg %p30
      $region30: #{_lambda_.1} parent=27 // pred_check_branch
        %155 = sbr.rel (%p153) target = $region32
      $region31: #{_lambda_.1} parent=27 // pred_region
        %p156 = scmp.lt.s32.totalorder %s10, 1
        %s157 = scalar_select %p156, %s10, 1
        %s158 = smul.addr %s157, 32
        %s159 = smul.addr %s158, 8
        %s160 = scalar_lea.vmem %s0, %s159
      $region32: #{_lambda_.1} parent=27 // pred_fallthru
        _
    $region28: #{_lambda_.1} parent=5 // pred_fallthru
      _
    %p161 = scmp.le.s32.totalorder 1, %s10
    %p162 = scmp.lt.s32.totalorder %s10, 3
    %p163 = pnand %p161, %p162
    %p164 = pneg %p163
    // Predicated region
    $region33: #{_lambda_.1} parent=5 // pred_check
      _
    $region34: #{_lambda_.1} parent=5 // pred_check_branch
      %166 = sbr.rel (%p163) target = $region36
    $region35: #{_lambda_.1} parent=5 // pred_region
      %s167 = ssub.s32 %s10, 1
      %p168 = scmp.lt.s32.totalorder %s15, 1
      %s169 = scalar_select %p168, %s15, 1
      %s170 = smul.addr %s169, 32
      %s171 = smul.addr %s170, 8
      %s172 = scalar_lea.vmem %s0, %s171
      %p173 = pneg %p36
      %p174 = pneg %p33
      %p175 = pneg %p57
      %p176 = pneg %p54
      %p177 = pneg %p78
      %p178 = pneg %p75
      %p179 = pneg %p99
      %p180 = pneg %p96
      %p181 = pneg %p125
      %p182 = pneg %p122
      %p183 = scmp.lt.s32.totalorder %s15, 1
      %s184 = scalar_select %p183, %s15, 1
      %s185 = smul.addr %s184, 32
      %s186 = smul.addr %s185, 8
      %s187 = scalar_lea.vmem %s4, %s186
      %p188 = scmp.lt.s32.totalorder %s15, 1
      %s189 = scalar_select %p188, %s15, 1
      %s190 = smul.addr %s189, 32
      %s191 = smul.addr %s190, 8
      %s192 = scalar_lea.vmem %s0, %s191
      %p193 = scmp.lt.s32.totalorder %s15, 1
      %s194 = scalar_select %p193, %s15, 1
      %s195 = smul.addr %s194, 32
      %s196 = smul.addr %s195, 8
      %s197 = scalar_lea.vmem %s4, %s196
      %v198 = vld [vmem:[%s192] sm:$0xff]
      %v199 = vld [vmem:[%s192 + $0x8] sm:$0xff]
      %v200 = vld [vmem:[%s192 + $0x10] sm:$0xff]
      %v201 = vld [vmem:[%s192 + $0x18] sm:$0xff]
      %v202 = vld [vmem:[%s192 + $0x20] sm:$0xff]
      %v203 = vld [vmem:[%s192 + $0x28] sm:$0xff]
      %v204 = vld [vmem:[%s192 + $0x30] sm:$0xff]
      %v205 = vld [vmem:[%s192 + $0x38] sm:$0xff]
      %v206 = vld [vmem:[%s192 + $0x40] sm:$0xff]
      %v207 = vld [vmem:[%s192 + $0x48] sm:$0xff]
      %v208 = vld [vmem:[%s192 + $0x50] sm:$0xff]
      %v209 = vld [vmem:[%s192 + $0x58] sm:$0xff]
      %v210 = vld [vmem:[%s192 + $0x60] sm:$0xff]
      %v211 = vld [vmem:[%s192 + $0x68] sm:$0xff]
      %v212 = vld [vmem:[%s192 + $0x70] sm:$0xff]
      %v213 = vld [vmem:[%s192 + $0x78] sm:$0xff]
      %v214 = vld [vmem:[%s192 + $0x80] sm:$0xff]
      %v215 = vld [vmem:[%s192 + $0x88] sm:$0xff]
      %v216 = vld [vmem:[%s192 + $0x90] sm:$0xff]
      %v217 = vld [vmem:[%s192 + $0x98] sm:$0xff]
      %v218 = vld [vmem:[%s192 + $0xa0] sm:$0xff]
      %v219 = vld [vmem:[%s192 + $0xa8] sm:$0xff]
      %v220 = vld [vmem:[%s192 + $0xb0] sm:$0xff]
      %v221 = vld [vmem:[%s192 + $0xb8] sm:$0xff]
      %v222 = vld [vmem:[%s192 + $0xc0] sm:$0xff]
      %v223 = vld [vmem:[%s192 + $0xc8] sm:$0xff]
      %v224 = vld [vmem:[%s192 + $0xd0] sm:$0xff]
      %v225 = vld [vmem:[%s192 + $0xd8] sm:$0xff]
      %v226 = vld [vmem:[%s192 + $0xe0] sm:$0xff]
      %v227 = vld [vmem:[%s192 + $0xe8] sm:$0xff]
      %v228 = vld [vmem:[%s192 + $0xf0] sm:$0xff]
      %v229 = vld [vmem:[%s192 + $0xf8] sm:$0xff]
      %v230 = vld [vmem:[%s1] sm:$0xf]
      %vm231 = vcmask 31744
      %v233 = vsel %vm231, %v198, 0
      %v236 = vsel %vm231, %v199, 0
      %v239 = vsel %vm231, %v200, 0
      %v242 = vsel %vm231, %v201, 0
      %v245 = vsel %vm231, %v202, 0
      %v248 = vsel %vm231, %v203, 0
      %v251 = vsel %vm231, %v204, 0
      %v254 = vsel %vm231, %v205, 0
      %v257 = vsel %vm231, %v206, 0
      %v260 = vsel %vm231, %v207, 0
      %v263 = vsel %vm231, %v208, 0
      %v266 = vsel %vm231, %v209, 0
      %v269 = vsel %vm231, %v210, 0
      %v272 = vsel %vm231, %v211, 0
      %v275 = vsel %vm231, %v212, 0
      %v278 = vsel %vm231, %v213, 0
      %v281 = vsel %vm231, %v214, 0
      %v284 = vsel %vm231, %v215, 0
      %v287 = vsel %vm231, %v216, 0
      %v290 = vsel %vm231, %v217, 0
      %v293 = vsel %vm231, %v218, 0
      %v296 = vsel %vm231, %v219, 0
      %v299 = vsel %vm231, %v220, 0
      %v302 = vsel %vm231, %v221, 0
      %v305 = vsel %vm231, %v222, 0
      %v308 = vsel %vm231, %v223, 0
      %v311 = vsel %vm231, %v224, 0
      %v314 = vsel %vm231, %v225, 0
      %v317 = vsel %vm231, %v226, 0
      %v320 = vsel %vm231, %v227, 0
      %v323 = vsel %vm231, %v228, 0
      %v326 = vsel %vm231, %v229, 0
      %vm328 = vcmask 1043456
      %v330 = vsel %vm328, %v230, 0
      %332 = vmatprep.subr.mxu0 0.0
      %333 = vmatpush1.msra.mxu0 %v330
      %334 = vmatprep.subr.mxu0 0.0
      %335 = vmatpush1.msra.mxu0 0.0
      %336 = vmatprep.subr.mxu0 0.0
      %337 = vmatpush1.msra.mxu0 0.0
      %338 = vmatprep.subr.mxu0 0.0
      %339 = vmatpush1.msra.mxu0 0.0
      %340 = vmatprep.subr.mxu0 0.0
      %341 = vmatpush1.msra.mxu0 0.0
      %342 = vmatprep.subr.mxu0 0.0
      %343 = vmatpush1.msra.mxu0 0.0
      %344 = vmatprep.subr.mxu0 0.0
      %345 = vmatpush1.msra.mxu0 0.0
      %346 = vmatprep.subr.mxu0 0.0
      %347 = vmatpush1.msra.mxu0 0.0
      %348 = vmatprep.subr.mxu0 0.0
      %349 = vmatpush1.msra.mxu0 0.0
      %350 = vmatprep.subr.mxu0 0.0
      %351 = vmatpush1.msra.mxu0 0.0
      %352 = vmatprep.subr.mxu0 0.0
      %353 = vmatpush1.msra.mxu0 0.0
      %354 = vmatprep.subr.mxu0 0.0
      %355 = vmatpush1.msra.mxu0 0.0
      %356 = vmatprep.subr.mxu0 0.0
      %357 = vmatpush1.msra.mxu0 0.0
      %358 = vmatprep.subr.mxu0 0.0
      %359 = vmatpush1.msra.mxu0 0.0
      %360 = vmatprep.subr.mxu0 0.0
      %361 = vmatpush1.msra.mxu0 0.0
      %362 = vmatprep.subr.mxu0 0.0
      %363 = vmatpush1.msra.mxu0 0.0
      %364 = vmatprep.subr.mxu0 0.0
      %365 = vmatpush1.msra.mxu0 0.0
      %366 = vmatprep.subr.mxu0 0.0
      %367 = vmatpush1.msra.mxu0 0.0
      %368 = vmatprep.subr.mxu0 0.0
      %369 = vmatpush1.msra.mxu0 0.0
      %370 = vmatprep.subr.mxu0 0.0
      %371 = vmatpush1.msra.mxu0 0.0
      %372 = vmatprep.subr.mxu0 0.0
      %373 = vmatpush1.msra.mxu0 0.0
      %374 = vmatprep.subr.mxu0 0.0
      %375 = vmatpush1.msra.mxu0 0.0
      %376 = vmatprep.subr.mxu0 0.0
      %377 = vmatpush1.msra.mxu0 0.0
      %378 = vmatprep.subr.mxu0 0.0
      %379 = vmatpush1.msra.mxu0 0.0
      %380 = vmatprep.subr.mxu0 0.0
      %381 = vmatpush1.msra.mxu0 0.0
      %382 = vmatprep.subr.mxu0 0.0
      %383 = vmatpush1.msra.mxu0 0.0
      %384 = vmatprep.subr.mxu0 0.0
      %385 = vmatpush1.msra.mxu0 0.0
      %386 = vmatprep.subr.mxu0 0.0
      %387 = vmatpush1.msra.mxu0 0.0
      %388 = vmatprep.subr.mxu0 0.0
      %389 = vmatpush1.msra.mxu0 0.0
      %390 = vmatprep.subr.mxu0 0.0
      %391 = vmatpush1.msra.mxu0 0.0
      %392 = vmatprep.subr.mxu0 0.0
      %393 = vmatpush1.msra.mxu0 0.0
      %394 = vmatprep.subr.mxu0 0.0
      %395 = vmatpush1.msra.mxu0 0.0
      %396 = vmatprep.mubr.f32.mxu0 0.0
      %397 = vmatmul.mubr.f32.gmra.mrb[0].mxu0 %v233
      %v398 = vpop.f32.mrb[0].mxu0
      %v399 = vadd.f32 0.0, %v398
      %v400 = vpop.f32.mrb[0].mxu0
      %401 = vmatprep.mubr.f32.mxu0 0.0
      %402 = vmatmul.mubr.f32.gmra.mrb[0].mxu0 %v236
      %v403 = vpop.f32.mrb[0].mxu0
      %v404 = vadd.f32 0.0, %v403
      %v405 = vpop.f32.mrb[0].mxu0
      %406 = vmatprep.mubr.f32.mxu0 0.0
      %407 = vmatmul.mubr.f32.gmra.mrb[0].mxu0 %v239
      %v408 = vpop.f32.mrb[0].mxu0
      %v409 = vadd.f32 0.0, %v408
      %v410 = vpop.f32.mrb[0].mxu0
      %411 = vmatprep.mubr.f32.mxu0 0.0
      %412 = vmatmul.mubr.f32.gmra.mrb[0].mxu0 %v242
      %v413 = vpop.f32.mrb[0].mxu0
      %v414 = vadd.f32 0.0, %v413
      %v415 = vpop.f32.mrb[0].mxu0
      %416 = vmatprep.mubr.f32.mxu0 0.0
      %417 = vmatmul.mubr.f32.gmra.mrb[0].mxu0 %v245
      %v418 = vpop.f32.mrb[0].mxu0
      %v419 = vadd.f32 0.0, %v418
      %v420 = vpop.f32.mrb[0].mxu0
      %421 = vmatprep.mubr.f32.mxu0 0.0
      %422 = vmatmul.mubr.f32.gmra.mrb[0].mxu0 %v248
      %v423 = vpop.f32.mrb[0].mxu0
      %v424 = vadd.f32 0.0, %v423
      %v425 = vpop.f32.mrb[0].mxu0
      %426 = vmatprep.mubr.f32.mxu0 0.0
      %427 = vmatmul.mubr.f32.gmra.mrb[0].mxu0 %v251
      %v428 = vpop.f32.mrb[0].mxu0
      %v429 = vadd.f32 0.0, %v428
      %v430 = vpop.f32.mrb[0].mxu0
      %431 = vmatprep.mubr.f32.mxu0 0.0
      %432 = vmatmul.mubr.f32.gmra.mrb[0].mxu0 %v254
      %v433 = vpop.f32.mrb[0].mxu0
      %v434 = vadd.f32 0.0, %v433
      %v435 = vpop.f32.mrb[0].mxu0
      %436 = vmatprep.mubr.f32.mxu0 0.0
      %437 = vmatmul.mubr.f32.gmra.mrb[0].mxu0 %v257
      %v438 = vpop.f32.mrb[0].mxu0
      %v439 = vadd.f32 0.0, %v438
      %v440 = vpop.f32.mrb[0].mxu0
      %441 = vmatprep.mubr.f32.mxu0 0.0
      %442 = vmatmul.mubr.f32.gmra.mrb[0].mxu0 %v260
      %v443 = vpop.f32.mrb[0].mxu0
      %v444 = vadd.f32 0.0, %v443
      %v445 = vpop.f32.mrb[0].mxu0
      %446 = vmatprep.mubr.f32.mxu0 0.0
      %447 = vmatmul.mubr.f32.gmra.mrb[0].mxu0 %v263
      %v448 = vpop.f32.mrb[0].mxu0
      %v449 = vadd.f32 0.0, %v448
      %v450 = vpop.f32.mrb[0].mxu0
      %451 = vmatprep.mubr.f32.mxu0 0.0
      %452 = vmatmul.mubr.f32.gmra.mrb[0].mxu0 %v266
      %v453 = vpop.f32.mrb[0].mxu0
      %v454 = vadd.f32 0.0, %v453
      %v455 = vpop.f32.mrb[0].mxu0
      %456 = vmatprep.mubr.f32.mxu0 0.0
      %457 = vmatmul.mubr.f32.gmra.mrb[0].mxu0 %v269
      %v458 = vpop.f32.mrb[0].mxu0
      %v459 = vadd.f32 0.0, %v458
      %v460 = vpop.f32.mrb[0].mxu0
      %461 = vmatprep.mubr.f32.mxu0 0.0
      %462 = vmatmul.mubr.f32.gmra.mrb[0].mxu0 %v272
      %v463 = vpop.f32.mrb[0].mxu0
      %v464 = vadd.f32 0.0, %v463
      %v465 = vpop.f32.mrb[0].mxu0
      %466 = vmatprep.mubr.f32.mxu0 0.0
      %467 = vmatmul.mubr.f32.gmra.mrb[0].mxu0 %v275
      %v468 = vpop.f32.mrb[0].mxu0
      %v469 = vadd.f32 0.0, %v468
      %v470 = vpop.f32.mrb[0].mxu0
      %471 = vmatprep.mubr.f32.mxu0 0.0
      %472 = vmatmul.mubr.f32.gmra.mrb[0].mxu0 %v278
      %v473 = vpop.f32.mrb[0].mxu0
      %v474 = vadd.f32 0.0, %v473
      %v475 = vpop.f32.mrb[0].mxu0
      %476 = vmatprep.mubr.f32.mxu0 0.0
      %477 = vmatmul.mubr.f32.gmra.mrb[0].mxu0 %v281
      %v478 = vpop.f32.mrb[0].mxu0
      %v479 = vadd.f32 0.0, %v478
      %v480 = vpop.f32.mrb[0].mxu0
      %481 = vmatprep.mubr.f32.mxu0 0.0
      %482 = vmatmul.mubr.f32.gmra.mrb[0].mxu0 %v284
      %v483 = vpop.f32.mrb[0].mxu0
      %v484 = vadd.f32 0.0, %v483
      %v485 = vpop.f32.mrb[0].mxu0
      %486 = vmatprep.mubr.f32.mxu0 0.0
      %487 = vmatmul.mubr.f32.gmra.mrb[0].mxu0 %v287
      %v488 = vpop.f32.mrb[0].mxu0
      %v489 = vadd.f32 0.0, %v488
      %v490 = vpop.f32.mrb[0].mxu0
      %491 = vmatprep.mubr.f32.mxu0 0.0
      %492 = vmatmul.mubr.f32.gmra.mrb[0].mxu0 %v290
      %v493 = vpop.f32.mrb[0].mxu0
      %v494 = vadd.f32 0.0, %v493
      %v495 = vpop.f32.mrb[0].mxu0
      %496 = vmatprep.mubr.f32.mxu0 0.0
      %497 = vmatmul.mubr.f32.gmra.mrb[0].mxu0 %v293
      %v498 = vpop.f32.mrb[0].mxu0
      %v499 = vadd.f32 0.0, %v498
      %v500 = vpop.f32.mrb[0].mxu0
      %501 = vmatprep.mubr.f32.mxu0 0.0
      %502 = vmatmul.mubr.f32.gmra.mrb[0].mxu0 %v296
      %v503 = vpop.f32.mrb[0].mxu0
      %v504 = vadd.f32 0.0, %v503
      %v505 = vpop.f32.mrb[0].mxu0
      %506 = vmatprep.mubr.f32.mxu0 0.0
      %507 = vmatmul.mubr.f32.gmra.mrb[0].mxu0 %v299
      %v508 = vpop.f32.mrb[0].mxu0
      %v509 = vadd.f32 0.0, %v508
      %v510 = vpop.f32.mrb[0].mxu0
      %511 = vmatprep.mubr.f32.mxu0 0.0
      %512 = vmatmul.mubr.f32.gmra.mrb[0].mxu0 %v302
      %v513 = vpop.f32.mrb[0].mxu0
      %v514 = vadd.f32 0.0, %v513
      %v515 = vpop.f32.mrb[0].mxu0
      %516 = vmatprep.mubr.f32.mxu0 0.0
      %517 = vmatmul.mubr.f32.gmra.mrb[0].mxu0 %v305
      %v518 = vpop.f32.mrb[0].mxu0
      %v519 = vadd.f32 0.0, %v518
      %v520 = vpop.f32.mrb[0].mxu0
      %521 = vmatprep.mubr.f32.mxu0 0.0
      %522 = vmatmul.mubr.f32.gmra.mrb[0].mxu0 %v308
      %v523 = vpop.f32.mrb[0].mxu0
      %v524 = vadd.f32 0.0, %v523
      %v525 = vpop.f32.mrb[0].mxu0
      %526 = vmatprep.mubr.f32.mxu0 0.0
      %527 = vmatmul.mubr.f32.gmra.mrb[0].mxu0 %v311
      %v528 = vpop.f32.mrb[0].mxu0
      %v529 = vadd.f32 0.0, %v528
      %v530 = vpop.f32.mrb[0].mxu0
      %531 = vmatprep.mubr.f32.mxu0 0.0
      %532 = vmatmul.mubr.f32.gmra.mrb[0].mxu0 %v314
      %v533 = vpop.f32.mrb[0].mxu0
      %v534 = vadd.f32 0.0, %v533
      %v535 = vpop.f32.mrb[0].mxu0
      %536 = vmatprep.mubr.f32.mxu0 0.0
      %537 = vmatmul.mubr.f32.gmra.mrb[0].mxu0 %v317
      %v538 = vpop.f32.mrb[0].mxu0
      %v539 = vadd.f32 0.0, %v538
      %v540 = vpop.f32.mrb[0].mxu0
      %541 = vmatprep.mubr.f32.mxu0 0.0
      %542 = vmatmul.mubr.f32.gmra.mrb[0].mxu0 %v320
      %v543 = vpop.f32.mrb[0].mxu0
      %v544 = vadd.f32 0.0, %v543
      %v545 = vpop.f32.mrb[0].mxu0
      %546 = vmatprep.mubr.f32.mxu0 0.0
      %547 = vmatmul.mubr.f32.gmra.mrb[0].mxu0 %v323
      %v548 = vpop.f32.mrb[0].mxu0
      %v549 = vadd.f32 0.0, %v548
      %v550 = vpop.f32.mrb[0].mxu0
      %551 = vmatprep.mubr.f32.mxu0 0.0
      %552 = vmatmul.mubr.f32.gmra.mrb[0].mxu0 %v326
      %v553 = vpop.f32.mrb[0].mxu0
      %v554 = vadd.f32 0.0, %v553
      %v555 = vpop.f32.mrb[0].mxu0
      %556 = vdwg.mxu0
      %vm557 = vcmask 261120
      %v558 = vsel %vm557, %v399, 0.0
      %v559 = vsel %vm557, %v404, 0.0
      %v560 = vadd.f32 %v558, %v559
      %v561 = vsel %vm557, %v409, 0.0
      %v562 = vadd.f32 %v560, %v561
      %v563 = vsel %vm557, %v414, 0.0
      %v564 = vadd.f32 %v562, %v563
      %v565 = vsel %vm557, %v419, 0.0
      %v566 = vadd.f32 %v564, %v565
      %v567 = vsel %vm557, %v424, 0.0
      %v568 = vadd.f32 %v566, %v567
      %v569 = vsel %vm557, %v429, 0.0
      %v570 = vadd.f32 %v568, %v569
      %v571 = vsel %vm557, %v434, 0.0
      %v572 = vadd.f32 %v570, %v571
      %v573 = vsel %vm557, %v439, 0.0
      %v574 = vadd.f32 %v572, %v573
      %v575 = vsel %vm557, %v444, 0.0
      %v576 = vadd.f32 %v574, %v575
      %v577 = vsel %vm557, %v449, 0.0
      %v578 = vadd.f32 %v576, %v577
      %v579 = vsel %vm557, %v454, 0.0
      %v580 = vadd.f32 %v578, %v579
      %v581 = vsel %vm557, %v459, 0.0
      %v582 = vadd.f32 %v580, %v581
      %v583 = vsel %vm557, %v464, 0.0
      %v584 = vadd.f32 %v582, %v583
      %v585 = vsel %vm557, %v469, 0.0
      %v586 = vadd.f32 %v584, %v585
      %v587 = vsel %vm557, %v474, 0.0
      %v588 = vadd.f32 %v586, %v587
      %v589 = vsel %vm557, %v479, 0.0
      %v590 = vadd.f32 %v588, %v589
      %v591 = vsel %vm557, %v484, 0.0
      %v592 = vadd.f32 %v590, %v591
      %v593 = vsel %vm557, %v489, 0.0
      %v594 = vadd.f32 %v592, %v593
      %v595 = vsel %vm557, %v494, 0.0
      %v596 = vadd.f32 %v594, %v595
      %v597 = vsel %vm557, %v499, 0.0
      %v598 = vadd.f32 %v596, %v597
      %v599 = vsel %vm557, %v504, 0.0
      %v600 = vadd.f32 %v598, %v599
      %v601 = vsel %vm557, %v509, 0.0
      %v602 = vadd.f32 %v600, %v601
      %v603 = vsel %vm557, %v514, 0.0
      %v604 = vadd.f32 %v602, %v603
      %v605 = vsel %vm557, %v519, 0.0
      %v606 = vadd.f32 %v604, %v605
      %v607 = vsel %vm557, %v524, 0.0
      %v608 = vadd.f32 %v606, %v607
      %v609 = vsel %vm557, %v529, 0.0
      %v610 = vadd.f32 %v608, %v609
      %v611 = vsel %vm557, %v534, 0.0
      %v612 = vadd.f32 %v610, %v611
      %v613 = vsel %vm557, %v539, 0.0
      %v614 = vadd.f32 %v612, %v613
      %v615 = vsel %vm557, %v544, 0.0
      %v616 = vadd.f32 %v614, %v615
      %v617 = vsel %vm557, %v549, 0.0
      %v618 = vadd.f32 %v616, %v617
      %v619 = vsel %vm557, %v554, 0.0
      %v620 = vadd.f32 %v618, %v619
      %v621 = vrot.slane %v620, 4
      %v622 = vadd.f32 %v620, %v621
      %v623 = vrot.slane %v622, 2
      %v624 = vadd.f32 %v622, %v623
      %v625 = vrot.slane %v624, 1
      %v626 = vadd.f32 %v624, %v625
      %v627 = vmul.f32 %v399, %v399
      %v628 = vmul.f32 %v404, %v404
      %v629 = vmul.f32 %v409, %v409
      %v630 = vmul.f32 %v414, %v414
      %v631 = vmul.f32 %v419, %v419
      %v632 = vmul.f32 %v424, %v424
      %v633 = vmul.f32 %v429, %v429
      %v634 = vmul.f32 %v434, %v434
      %v635 = vmul.f32 %v439, %v439
      %v636 = vmul.f32 %v444, %v444
      %v637 = vmul.f32 %v449, %v449
      %v638 = vmul.f32 %v454, %v454
      %v639 = vmul.f32 %v459, %v459
      %v640 = vmul.f32 %v464, %v464
      %v641 = vmul.f32 %v469, %v469
      %v642 = vmul.f32 %v474, %v474
      %v643 = vmul.f32 %v479, %v479
      %v644 = vmul.f32 %v484, %v484
      %v645 = vmul.f32 %v489, %v489
      %v646 = vmul.f32 %v494, %v494
      %v647 = vmul.f32 %v499, %v499
      %v648 = vmul.f32 %v504, %v504
      %v649 = vmul.f32 %v509, %v509
      %v650 = vmul.f32 %v514, %v514
      %v651 = vmul.f32 %v519, %v519
      %v652 = vmul.f32 %v524, %v524
      %v653 = vmul.f32 %v529, %v529
      %v654 = vmul.f32 %v534, %v534
      %v655 = vmul.f32 %v539, %v539
      %v656 = vmul.f32 %v544, %v544
      %v657 = vmul.f32 %v549, %v549
      %v658 = vmul.f32 %v554, %v554
      %v659 = vsel %vm557, %v627, 0.0
      %v660 = vsel %vm557, %v628, 0.0
      %v661 = vadd.f32 %v659, %v660
      %v662 = vsel %vm557, %v629, 0.0
      %v663 = vadd.f32 %v661, %v662
      %v664 = vsel %vm557, %v630, 0.0
      %v665 = vadd.f32 %v663, %v664
      %v666 = vsel %vm557, %v631, 0.0
      %v667 = vadd.f32 %v665, %v666
      %v668 = vsel %vm557, %v632, 0.0
      %v669 = vadd.f32 %v667, %v668
      %v670 = vsel %vm557, %v633, 0.0
      %v671 = vadd.f32 %v669, %v670
      %v672 = vsel %vm557, %v634, 0.0
      %v673 = vadd.f32 %v671, %v672
      %v674 = vsel %vm557, %v635, 0.0
      %v675 = vadd.f32 %v673, %v674
      %v676 = vsel %vm557, %v636, 0.0
      %v677 = vadd.f32 %v675, %v676
      %v678 = vsel %vm557, %v637, 0.0
      %v679 = vadd.f32 %v677, %v678
      %v680 = vsel %vm557, %v638, 0.0
      %v681 = vadd.f32 %v679, %v680
      %v682 = vsel %vm557, %v639, 0.0
      %v683 = vadd.f32 %v681, %v682
      %v684 = vsel %vm557, %v640, 0.0
      %v685 = vadd.f32 %v683, %v684
      %v686 = vsel %vm557, %v641, 0.0
      %v687 = vadd.f32 %v685, %v686
      %v688 = vsel %vm557, %v642, 0.0
      %v689 = vadd.f32 %v687, %v688
      %v690 = vsel %vm557, %v643, 0.0
      %v691 = vadd.f32 %v689, %v690
      %v692 = vsel %vm557, %v644, 0.0
      %v693 = vadd.f32 %v691, %v692
      %v694 = vsel %vm557, %v645, 0.0
      %v695 = vadd.f32 %v693, %v694
      %v696 = vsel %vm557, %v646, 0.0
      %v697 = vadd.f32 %v695, %v696
      %v698 = vsel %vm557, %v647, 0.0
      %v699 = vadd.f32 %v697, %v698
      %v700 = vsel %vm557, %v648, 0.0
      %v701 = vadd.f32 %v699, %v700
      %v702 = vsel %vm557, %v649, 0.0
      %v703 = vadd.f32 %v701, %v702
      %v704 = vsel %vm557, %v650, 0.0
      %v705 = vadd.f32 %v703, %v704
      %v706 = vsel %vm557, %v651, 0.0
      %v707 = vadd.f32 %v705, %v706
      %v708 = vsel %vm557, %v652, 0.0
      %v709 = vadd.f32 %v707, %v708
      %v710 = vsel %vm557, %v653, 0.0
      %v711 = vadd.f32 %v709, %v710
      %v712 = vsel %vm557, %v654, 0.0
      %v713 = vadd.f32 %v711, %v712
      %v714 = vsel %vm557, %v655, 0.0
      %v715 = vadd.f32 %v713, %v714
      %v716 = vsel %vm557, %v656, 0.0
      %v717 = vadd.f32 %v715, %v716
      %v718 = vsel %vm557, %v657, 0.0
      %v719 = vadd.f32 %v717, %v718
      %v720 = vsel %vm557, %v658, 0.0
      %v721 = vadd.f32 %v719, %v720
      %v722 = vrot.slane %v721, 4
      %v723 = vadd.f32 %v721, %v722
      %v724 = vrot.slane %v723, 2
      %v725 = vadd.f32 %v723, %v724
      %v726 = vrot.slane %v725, 1
      %v727 = vadd.f32 %v725, %v726
      %v728 = vld [vmem:[%s2] sm:$0xff]
      %v729 = vld [vmem:[%s2 + $0x8] sm:$0xff]
      %v730 = vld [vmem:[%s2 + $0x10] sm:$0xff]
      %v731 = vld [vmem:[%s2 + $0x18] sm:$0xff]
      %v733 = vsel %vm557, %v626, 0
      %735 = vmatprep.subr.mxu0 0.0
      %736 = vmatpush1.msra.mxu0 %v728
      %737 = vmatprep.subr.mxu0 0.0
      %738 = vmatpush1.msra.mxu0 %v729
      %739 = vmatprep.subr.mxu0 0.0
      %740 = vmatpush1.msra.mxu0 %v730
      %741 = vmatprep.subr.mxu0 0.0
      %742 = vmatpush1.msra.mxu0 %v731
      %743 = vmatprep.subr.mxu0 0.0
      %744 = vmatpush1.msra.mxu0 0.0
      %745 = vmatprep.subr.mxu0 0.0
      %746 = vmatpush1.msra.mxu0 0.0
      %747 = vmatprep.subr.mxu0 0.0
      %748 = vmatpush1.msra.mxu0 0.0
      %749 = vmatprep.subr.mxu0 0.0
      %750 = vmatpush1.msra.mxu0 0.0
      %751 = vmatprep.subr.mxu0 0.0
      %752 = vmatpush1.msra.mxu0 0.0
      %753 = vmatprep.subr.mxu0 0.0
      %754 = vmatpush1.msra.mxu0 0.0
      %755 = vmatprep.subr.mxu0 0.0
      %756 = vmatpush1.msra.mxu0 0.0
      %757 = vmatprep.subr.mxu0 0.0
      %758 = vmatpush1.msra.mxu0 0.0
      %759 = vmatprep.subr.mxu0 0.0
      %760 = vmatpush1.msra.mxu0 0.0
      %761 = vmatprep.subr.mxu0 0.0
      %762 = vmatpush1.msra.mxu0 0.0
      %763 = vmatprep.subr.mxu0 0.0
      %764 = vmatpush1.msra.mxu0 0.0
      %765 = vmatprep.subr.mxu0 0.0
      %766 = vmatpush1.msra.mxu0 0.0
      %767 = vmatprep.subr.mxu0 0.0
      %768 = vmatpush1.msra.mxu0 0.0
      %769 = vmatprep.subr.mxu0 0.0
      %770 = vmatpush1.msra.mxu0 0.0
      %771 = vmatprep.subr.mxu0 0.0
      %772 = vmatpush1.msra.mxu0 0.0
      %773 = vmatprep.subr.mxu0 0.0
      %774 = vmatpush1.msra.mxu0 0.0
      %775 = vmatprep.subr.mxu0 0.0
      %776 = vmatpush1.msra.mxu0 0.0
      %777 = vmatprep.subr.mxu0 0.0
      %778 = vmatpush1.msra.mxu0 0.0
      %779 = vmatprep.subr.mxu0 0.0
      %780 = vmatpush1.msra.mxu0 0.0
      %781 = vmatprep.subr.mxu0 0.0
      %782 = vmatpush1.msra.mxu0 0.0
      %783 = vmatprep.subr.mxu0 0.0
      %784 = vmatpush1.msra.mxu0 0.0
      %785 = vmatprep.subr.mxu0 0.0
      %786 = vmatpush1.msra.mxu0 0.0
      %787 = vmatprep.subr.mxu0 0.0
      %788 = vmatpush1.msra.mxu0 0.0
      %789 = vmatprep.subr.mxu0 0.0
      %790 = vmatpush1.msra.mxu0 0.0
      %791 = vmatprep.subr.mxu0 0.0
      %792 = vmatpush1.msra.mxu0 0.0
      %793 = vmatprep.subr.mxu0 0.0
      %794 = vmatpush1.msra.mxu0 0.0
      %795 = vmatprep.subr.mxu0 0.0
      %796 = vmatpush1.msra.mxu0 0.0
      %797 = vmatprep.subr.mxu0 0.0
      %798 = vmatpush1.msra.mxu0 0.0
      %799 = vmatprep.mubr.f32.mxu0 0.0
      %800 = vmatmul.mubr.f32.gmra.mrb[0].mxu0 %v733
      %v801 = vpop.f32.mrb[0].mxu0
      %v802 = vadd.f32 0.0, %v801
      %v803 = vpop.f32.mrb[0].mxu0
      %804 = vdwg.mxu0
      %v806 = vsel %vm557, %v727, 0
      %808 = vmatprep.subr.mxu0 0.0
      %809 = vmatpush1.msra.mxu0 %v728
      %810 = vmatprep.subr.mxu0 0.0
      %811 = vmatpush1.msra.mxu0 %v729
      %812 = vmatprep.subr.mxu0 0.0
      %813 = vmatpush1.msra.mxu0 %v730
      %814 = vmatprep.subr.mxu0 0.0
      %815 = vmatpush1.msra.mxu0 %v731
      %816 = vmatprep.subr.mxu0 0.0
      %817 = vmatpush1.msra.mxu0 0.0
      %818 = vmatprep.subr.mxu0 0.0
      %819 = vmatpush1.msra.mxu0 0.0
      %820 = vmatprep.subr.mxu0 0.0
      %821 = vmatpush1.msra.mxu0 0.0
      %822 = vmatprep.subr.mxu0 0.0
      %823 = vmatpush1.msra.mxu0 0.0
      %824 = vmatprep.subr.mxu0 0.0
      %825 = vmatpush1.msra.mxu0 0.0
      %826 = vmatprep.subr.mxu0 0.0
      %827 = vmatpush1.msra.mxu0 0.0
      %828 = vmatprep.subr.mxu0 0.0
      %829 = vmatpush1.msra.mxu0 0.0
      %830 = vmatprep.subr.mxu0 0.0
      %831 = vmatpush1.msra.mxu0 0.0
      %832 = vmatprep.subr.mxu0 0.0
      %833 = vmatpush1.msra.mxu0 0.0
      %834 = vmatprep.subr.mxu0 0.0
      %835 = vmatpush1.msra.mxu0 0.0
      %836 = vmatprep.subr.mxu0 0.0
      %837 = vmatpush1.msra.mxu0 0.0
      %838 = vmatprep.subr.mxu0 0.0
      %839 = vmatpush1.msra.mxu0 0.0
      %840 = vmatprep.subr.mxu0 0.0
      %841 = vmatpush1.msra.mxu0 0.0
      %842 = vmatprep.subr.mxu0 0.0
      %843 = vmatpush1.msra.mxu0 0.0
      %844 = vmatprep.subr.mxu0 0.0
      %845 = vmatpush1.msra.mxu0 0.0
      %846 = vmatprep.subr.mxu0 0.0
      %847 = vmatpush1.msra.mxu0 0.0
      %848 = vmatprep.subr.mxu0 0.0
      %849 = vmatpush1.msra.mxu0 0.0
      %850 = vmatprep.subr.mxu0 0.0
      %851 = vmatpush1.msra.mxu0 0.0
      %852 = vmatprep.subr.mxu0 0.0
      %853 = vmatpush1.msra.mxu0 0.0
      %854 = vmatprep.subr.mxu0 0.0
      %855 = vmatpush1.msra.mxu0 0.0
      %856 = vmatprep.subr.mxu0 0.0
      %857 = vmatpush1.msra.mxu0 0.0
      %858 = vmatprep.subr.mxu0 0.0
      %859 = vmatpush1.msra.mxu0 0.0
      %860 = vmatprep.subr.mxu0 0.0
      %861 = vmatpush1.msra.mxu0 0.0
      %862 = vmatprep.subr.mxu0 0.0
      %863 = vmatpush1.msra.mxu0 0.0
      %864 = vmatprep.subr.mxu0 0.0
      %865 = vmatpush1.msra.mxu0 0.0
      %866 = vmatprep.subr.mxu0 0.0
      %867 = vmatpush1.msra.mxu0 0.0
      %868 = vmatprep.subr.mxu0 0.0
      %869 = vmatpush1.msra.mxu0 0.0
      %870 = vmatprep.subr.mxu0 0.0
      %871 = vmatpush1.msra.mxu0 0.0
      %872 = vmatprep.mubr.f32.mxu0 0.0
      %873 = vmatmul.mubr.f32.gmra.mrb[0].mxu0 %v806
      %v874 = vpop.f32.mrb[0].mxu0
      %v875 = vadd.f32 0.0, %v874
      %v876 = vpop.f32.mrb[0].mxu0
      %877 = vdwg.mxu0
      %v878 = vmul.f32 %v802, 0.0009765625
      %v879 = vmul.f32 %v875, 0.0009765625
      %v880 = vmul.f32 %v878, %v878
      %v881 = vsub.f32 %v879, %v880
      %v882 = vadd.f32 %v881, 1e-05
      %v883 = vrsqrt.pop %v882
      %v884 = vld [vmem:[%s3] sm:$0xff]
      %vm885 = vcmask 64512
      %v887 = vsel %vm885, %v883, 0
      %889 = vmatprep.subr.mxu0 0.0
      %890 = vmatpush1.msra.mxu0 %v884
      %891 = vmatprep.subr.mxu0 0.0
      %892 = vmatpush1.msra.mxu0 0.0
      %893 = vmatprep.subr.mxu0 0.0
      %894 = vmatpush1.msra.mxu0 0.0
      %895 = vmatprep.subr.mxu0 0.0
      %896 = vmatpush1.msra.mxu0 0.0
      %897 = vmatprep.subr.mxu0 0.0
      %898 = vmatpush1.msra.mxu0 0.0
      %899 = vmatprep.subr.mxu0 0.0
      %900 = vmatpush1.msra.mxu0 0.0
      %901 = vmatprep.subr.mxu0 0.0
      %902 = vmatpush1.msra.mxu0 0.0
      %903 = vmatprep.subr.mxu0 0.0
      %904 = vmatpush1.msra.mxu0 0.0
      %905 = vmatprep.subr.mxu0 0.0
      %906 = vmatpush1.msra.mxu0 0.0
      %907 = vmatprep.subr.mxu0 0.0
      %908 = vmatpush1.msra.mxu0 0.0
      %909 = vmatprep.subr.mxu0 0.0
      %910 = vmatpush1.msra.mxu0 0.0
      %911 = vmatprep.subr.mxu0 0.0
      %912 = vmatpush1.msra.mxu0 0.0
      %913 = vmatprep.subr.mxu0 0.0
      %914 = vmatpush1.msra.mxu0 0.0
      %915 = vmatprep.subr.mxu0 0.0
      %916 = vmatpush1.msra.mxu0 0.0
      %917 = vmatprep.subr.mxu0 0.0
      %918 = vmatpush1.msra.mxu0 0.0
      %919 = vmatprep.subr.mxu0 0.0
      %920 = vmatpush1.msra.mxu0 0.0
      %921 = vmatprep.subr.mxu0 0.0
      %922 = vmatpush1.msra.mxu0 0.0
      %923 = vmatprep.subr.mxu0 0.0
      %924 = vmatpush1.msra.mxu0 0.0
      %925 = vmatprep.subr.mxu0 0.0
      %926 = vmatpush1.msra.mxu0 0.0
      %927 = vmatprep.subr.mxu0 0.0
      %928 = vmatpush1.msra.mxu0 0.0
      %929 = vmatprep.subr.mxu0 0.0
      %930 = vmatpush1.msra.mxu0 0.0
      %931 = vmatprep.subr.mxu0 0.0
      %932 = vmatpush1.msra.mxu0 0.0
      %933 = vmatprep.subr.mxu0 0.0
      %934 = vmatpush1.msra.mxu0 0.0
      %935 = vmatprep.subr.mxu0 0.0
      %936 = vmatpush1.msra.mxu0 0.0
      %937 = vmatprep.subr.mxu0 0.0
      %938 = vmatpush1.msra.mxu0 0.0
      %939 = vmatprep.subr.mxu0 0.0
      %940 = vmatpush1.msra.mxu0 0.0
      %941 = vmatprep.subr.mxu0 0.0
      %942 = vmatpush1.msra.mxu0 0.0
      %943 = vmatprep.subr.mxu0 0.0
      %944 = vmatpush1.msra.mxu0 0.0
      %945 = vmatprep.subr.mxu0 0.0
      %946 = vmatpush1.msra.mxu0 0.0
      %947 = vmatprep.subr.mxu0 0.0
      %948 = vmatpush1.msra.mxu0 0.0
      %949 = vmatprep.subr.mxu0 0.0
      %950 = vmatpush1.msra.mxu0 0.0
      %951 = vmatprep.subr.mxu0 0.0
      %952 = vmatpush1.msra.mxu0 0.0
      %953 = vmatprep.mubr.f32.mxu0 0.0
      %954 = vmatmul.mubr.f32.gmra.mrb[0].mxu0 %v887
      %v955 = vpop.f32.mrb[0].mxu0
      %v956 = vadd.f32 0.0, %v955
      %v957 = vpop.f32.mrb[0].mxu0
      %958 = vdwg.mxu0
      %v959 = vmul.f32 %v878, %v883
      %v961 = vsel %vm885, %v959, 0
      %963 = vmatprep.subr.mxu0 0.0
      %964 = vmatpush1.msra.mxu0 %v884
      %965 = vmatprep.subr.mxu0 0.0
      %966 = vmatpush1.msra.mxu0 0.0
      %967 = vmatprep.subr.mxu0 0.0
      %968 = vmatpush1.msra.mxu0 0.0
      %969 = vmatprep.subr.mxu0 0.0
      %970 = vmatpush1.msra.mxu0 0.0
      %971 = vmatprep.subr.mxu0 0.0
      %972 = vmatpush1.msra.mxu0 0.0
      %973 = vmatprep.subr.mxu0 0.0
      %974 = vmatpush1.msra.mxu0 0.0
      %975 = vmatprep.subr.mxu0 0.0
      %976 = vmatpush1.msra.mxu0 0.0
      %977 = vmatprep.subr.mxu0 0.0
      %978 = vmatpush1.msra.mxu0 0.0
      %979 = vmatprep.subr.mxu0 0.0
      %980 = vmatpush1.msra.mxu0 0.0
      %981 = vmatprep.subr.mxu0 0.0
      %982 = vmatpush1.msra.mxu0 0.0
      %983 = vmatprep.subr.mxu0 0.0
      %984 = vmatpush1.msra.mxu0 0.0
      %985 = vmatprep.subr.mxu0 0.0
      %986 = vmatpush1.msra.mxu0 0.0
      %987 = vmatprep.subr.mxu0 0.0
      %988 = vmatpush1.msra.mxu0 0.0
      %989 = vmatprep.subr.mxu0 0.0
      %990 = vmatpush1.msra.mxu0 0.0
      %991 = vmatprep.subr.mxu0 0.0
      %992 = vmatpush1.msra.mxu0 0.0
      %993 = vmatprep.subr.mxu0 0.0
      %994 = vmatpush1.msra.mxu0 0.0
      %995 = vmatprep.subr.mxu0 0.0
      %996 = vmatpush1.msra.mxu0 0.0
      %997 = vmatprep.subr.mxu0 0.0
      %998 = vmatpush1.msra.mxu0 0.0
      %999 = vmatprep.subr.mxu0 0.0
      %1000 = vmatpush1.msra.mxu0 0.0
      %1001 = vmatprep.subr.mxu0 0.0
      %1002 = vmatpush1.msra.mxu0 0.0
      %1003 = vmatprep.subr.mxu0 0.0
      %1004 = vmatpush1.msra.mxu0 0.0
      %1005 = vmatprep.subr.mxu0 0.0
      %1006 = vmatpush1.msra.mxu0 0.0
      %1007 = vmatprep.subr.mxu0 0.0
      %1008 = vmatpush1.msra.mxu0 0.0
      %1009 = vmatprep.subr.mxu0 0.0
      %1010 = vmatpush1.msra.mxu0 0.0
      %1011 = vmatprep.subr.mxu0 0.0
      %1012 = vmatpush1.msra.mxu0 0.0
      %1013 = vmatprep.subr.mxu0 0.0
      %1014 = vmatpush1.msra.mxu0 0.0
      %1015 = vmatprep.subr.mxu0 0.0
      %1016 = vmatpush1.msra.mxu0 0.0
      %1017 = vmatprep.subr.mxu0 0.0
      %1018 = vmatpush1.msra.mxu0 0.0
      %1019 = vmatprep.subr.mxu0 0.0
      %1020 = vmatpush1.msra.mxu0 0.0
      %1021 = vmatprep.subr.mxu0 0.0
      %1022 = vmatpush1.msra.mxu0 0.0
      %1023 = vmatprep.subr.mxu0 0.0
      %1024 = vmatpush1.msra.mxu0 0.0
      %1025 = vmatprep.subr.mxu0 0.0
      %1026 = vmatpush1.msra.mxu0 0.0
      %1027 = vmatprep.mubr.f32.mxu0 0.0
      %1028 = vmatmul.mubr.f32.gmra.mrb[0].mxu0 %v961
      %v1029 = vpop.f32.mrb[0].mxu0
      %v1030 = vadd.f32 0.0, %v1029
      %v1031 = vpop.f32.mrb[0].mxu0
      %1032 = vdwg.mxu0
      %v1033 = vlaneseq
      %v1034 = vshrl.u32 %v1033, 7
      %v1035 = vsub.s32 0, %v1034
      %v1036 = vrot.slane %v956, %v1035
      %v1037 = vmul.f32 %v399, %v1036
      %v1038 = vmul.f32 %v404, %v1036
      %v1039 = vmul.f32 %v409, %v1036
      %v1040 = vmul.f32 %v414, %v1036
      %v1041 = vmul.f32 %v419, %v1036
      %v1042 = vmul.f32 %v424, %v1036
      %v1043 = vmul.f32 %v429, %v1036
      %v1044 = vmul.f32 %v434, %v1036
      %v1045 = vmul.f32 %v439, %v1036
      %v1046 = vmul.f32 %v444, %v1036
      %v1047 = vmul.f32 %v449, %v1036
      %v1048 = vmul.f32 %v454, %v1036
      %v1049 = vmul.f32 %v459, %v1036
      %v1050 = vmul.f32 %v464, %v1036
      %v1051 = vmul.f32 %v469, %v1036
      %v1052 = vmul.f32 %v474, %v1036
      %v1053 = vmul.f32 %v479, %v1036
      %v1054 = vmul.f32 %v484, %v1036
      %v1055 = vmul.f32 %v489, %v1036
      %v1056 = vmul.f32 %v494, %v1036
      %v1057 = vmul.f32 %v499, %v1036
      %v1058 = vmul.f32 %v504, %v1036
      %v1059 = vmul.f32 %v509, %v1036
      %v1060 = vmul.f32 %v514, %v1036
      %v1061 = vmul.f32 %v519, %v1036
      %v1062 = vmul.f32 %v524, %v1036
      %v1063 = vmul.f32 %v529, %v1036
      %v1064 = vmul.f32 %v534, %v1036
      %v1065 = vmul.f32 %v539, %v1036
      %v1066 = vmul.f32 %v544, %v1036
      %v1067 = vmul.f32 %v549, %v1036
      %v1068 = vmul.f32 %v554, %v1036
      %v1069 = vlaneseq
      %v1070 = vshrl.u32 %v1069, 7
      %v1071 = vsub.s32 0, %v1070
      %v1072 = vrot.slane %v1030, %v1071
      %v1073 = vsub.f32 %v1037, %v1072
      %v1074 = vsub.f32 %v1038, %v1072
      %v1075 = vsub.f32 %v1039, %v1072
      %v1076 = vsub.f32 %v1040, %v1072
      %v1077 = vsub.f32 %v1041, %v1072
      %v1078 = vsub.f32 %v1042, %v1072
      %v1079 = vsub.f32 %v1043, %v1072
      %v1080 = vsub.f32 %v1044, %v1072
      %v1081 = vsub.f32 %v1045, %v1072
      %v1082 = vsub.f32 %v1046, %v1072
      %v1083 = vsub.f32 %v1047, %v1072
      %v1084 = vsub.f32 %v1048, %v1072
      %v1085 = vsub.f32 %v1049, %v1072
      %v1086 = vsub.f32 %v1050, %v1072
      %v1087 = vsub.f32 %v1051, %v1072
      %v1088 = vsub.f32 %v1052, %v1072
      %v1089 = vsub.f32 %v1053, %v1072
      %v1090 = vsub.f32 %v1054, %v1072
      %v1091 = vsub.f32 %v1055, %v1072
      %v1092 = vsub.f32 %v1056, %v1072
      %v1093 = vsub.f32 %v1057, %v1072
      %v1094 = vsub.f32 %v1058, %v1072
      %v1095 = vsub.f32 %v1059, %v1072
      %v1096 = vsub.f32 %v1060, %v1072
      %v1097 = vsub.f32 %v1061, %v1072
      %v1098 = vsub.f32 %v1062, %v1072
      %v1099 = vsub.f32 %v1063, %v1072
      %v1100 = vsub.f32 %v1064, %v1072
      %v1101 = vsub.f32 %v1065, %v1072
      %v1102 = vsub.f32 %v1066, %v1072
      %v1103 = vsub.f32 %v1067, %v1072
      %v1104 = vsub.f32 %v1068, %v1072
      %vm1105 = vcmp.ge.f32.partialorder %v1073, 0.0
      %vm1106 = vcmp.ge.f32.partialorder %v1074, 0.0
      %vm1107 = vcmp.ge.f32.partialorder %v1075, 0.0
      %vm1108 = vcmp.ge.f32.partialorder %v1076, 0.0
      %vm1109 = vcmp.ge.f32.partialorder %v1077, 0.0
      %vm1110 = vcmp.ge.f32.partialorder %v1078, 0.0
      %vm1111 = vcmp.ge.f32.partialorder %v1079, 0.0
      %vm1112 = vcmp.ge.f32.partialorder %v1080, 0.0
      %vm1113 = vcmp.ge.f32.partialorder %v1081, 0.0
      %vm1114 = vcmp.ge.f32.partialorder %v1082, 0.0
      %vm1115 = vcmp.ge.f32.partialorder %v1083, 0.0
      %vm1116 = vcmp.ge.f32.partialorder %v1084, 0.0
      %vm1117 = vcmp.ge.f32.partialorder %v1085, 0.0
      %vm1118 = vcmp.ge.f32.partialorder %v1086, 0.0
      %vm1119 = vcmp.ge.f32.partialorder %v1087, 0.0
      %vm1120 = vcmp.ge.f32.partialorder %v1088, 0.0
      %vm1121 = vcmp.ge.f32.partialorder %v1089, 0.0
      %vm1122 = vcmp.ge.f32.partialorder %v1090, 0.0
      %vm1123 = vcmp.ge.f32.partialorder %v1091, 0.0
      %vm1124 = vcmp.ge.f32.partialorder %v1092, 0.0
      %vm1125 = vcmp.ge.f32.partialorder %v1093, 0.0
      %vm1126 = vcmp.ge.f32.partialorder %v1094, 0.0
      %vm1127 = vcmp.ge.f32.partialorder %v1095, 0.0
      %vm1128 = vcmp.ge.f32.partialorder %v1096, 0.0
      %vm1129 = vcmp.ge.f32.partialorder %v1097, 0.0
      %vm1130 = vcmp.ge.f32.partialorder %v1098, 0.0
      %vm1131 = vcmp.ge.f32.partialorder %v1099, 0.0
      %vm1132 = vcmp.ge.f32.partialorder %v1100, 0.0
      %vm1133 = vcmp.ge.f32.partialorder %v1101, 0.0
      %vm1134 = vcmp.ge.f32.partialorder %v1102, 0.0
      %vm1135 = vcmp.ge.f32.partialorder %v1103, 0.0
      %vm1136 = vcmp.ge.f32.partialorder %v1104, 0.0
      %v1137 = vmul.f32 %v1073, 0.2
      %v1138 = vmul.f32 %v1074, 0.2
      %v1139 = vmul.f32 %v1075, 0.2
      %v1140 = vmul.f32 %v1076, 0.2
      %v1141 = vmul.f32 %v1077, 0.2
      %v1142 = vmul.f32 %v1078, 0.2
      %v1143 = vmul.f32 %v1079, 0.2
      %v1144 = vmul.f32 %v1080, 0.2
      %v1145 = vmul.f32 %v1081, 0.2
      %v1146 = vmul.f32 %v1082, 0.2
      %v1147 = vmul.f32 %v1083, 0.2
      %v1148 = vmul.f32 %v1084, 0.2
      %v1149 = vmul.f32 %v1085, 0.2
      %v1150 = vmul.f32 %v1086, 0.2
      %v1151 = vmul.f32 %v1087, 0.2
      %v1152 = vmul.f32 %v1088, 0.2
      %v1153 = vmul.f32 %v1089, 0.2
      %v1154 = vmul.f32 %v1090, 0.2
      %v1155 = vmul.f32 %v1091, 0.2
      %v1156 = vmul.f32 %v1092, 0.2
      %v1157 = vmul.f32 %v1093, 0.2
      %v1158 = vmul.f32 %v1094, 0.2
      %v1159 = vmul.f32 %v1095, 0.2
      %v1160 = vmul.f32 %v1096, 0.2
      %v1161 = vmul.f32 %v1097, 0.2
      %v1162 = vmul.f32 %v1098, 0.2
      %v1163 = vmul.f32 %v1099, 0.2
      %v1164 = vmul.f32 %v1100, 0.2
      %v1165 = vmul.f32 %v1101, 0.2
      %v1166 = vmul.f32 %v1102, 0.2
      %v1167 = vmul.f32 %v1103, 0.2
      %v1168 = vmul.f32 %v1104, 0.2
      %v1169 = vsel %vm1105, %v1073, %v1137
      %v1170 = vsel %vm1106, %v1074, %v1138
      %v1171 = vsel %vm1107, %v1075, %v1139
      %v1172 = vsel %vm1108, %v1076, %v1140
      %v1173 = vsel %vm1109, %v1077, %v1141
      %v1174 = vsel %vm1110, %v1078, %v1142
      %v1175 = vsel %vm1111, %v1079, %v1143
      %v1176 = vsel %vm1112, %v1080, %v1144
      %v1177 = vsel %vm1113, %v1081, %v1145
      %v1178 = vsel %vm1114, %v1082, %v1146
      %v1179 = vsel %vm1115, %v1083, %v1147
      %v1180 = vsel %vm1116, %v1084, %v1148
      %v1181 = vsel %vm1117, %v1085, %v1149
      %v1182 = vsel %vm1118, %v1086, %v1150
      %v1183 = vsel %vm1119, %v1087, %v1151
      %v1184 = vsel %vm1120, %v1088, %v1152
      %v1185 = vsel %vm1121, %v1089, %v1153
      %v1186 = vsel %vm1122, %v1090, %v1154
      %v1187 = vsel %vm1123, %v1091, %v1155
      %v1188 = vsel %vm1124, %v1092, %v1156
      %v1189 = vsel %vm1125, %v1093, %v1157
      %v1190 = vsel %vm1126, %v1094, %v1158
      %v1191 = vsel %vm1127, %v1095, %v1159
      %v1192 = vsel %vm1128, %v1096, %v1160
      %v1193 = vsel %vm1129, %v1097, %v1161
      %v1194 = vsel %vm1130, %v1098, %v1162
      %v1195 = vsel %vm1131, %v1099, %v1163
      %v1196 = vsel %vm1132, %v1100, %v1164
      %v1197 = vsel %vm1133, %v1101, %v1165
      %v1198 = vsel %vm1134, %v1102, %v1166
      %v1199 = vsel %vm1135, %v1103, %v1167
      %v1200 = vsel %vm1136, %v1104, %v1168
      %1201 = vst.msk [vmem:[%s197] sm:$0xff] %vm557, %v1169
      %1202 = vst.msk [vmem:[%s197 + $0x8] sm:$0xff] %vm557, %v1170
      %1203 = vst.msk [vmem:[%s197 + $0x10] sm:$0xff] %vm557, %v1171
      %1204 = vst.msk [vmem:[%s197 + $0x18] sm:$0xff] %vm557, %v1172
      %1205 = vst.msk [vmem:[%s197 + $0x20] sm:$0xff] %vm557, %v1173
      %1206 = vst.msk [vmem:[%s197 + $0x28] sm:$0xff] %vm557, %v1174
      %1207 = vst.msk [vmem:[%s197 + $0x30] sm:$0xff] %vm557, %v1175
      %1208 = vst.msk [vmem:[%s197 + $0x38] sm:$0xff] %vm557, %v1176
      %1209 = vst.msk [vmem:[%s197 + $0x40] sm:$0xff] %vm557, %v1177
      %1210 = vst.msk [vmem:[%s197 + $0x48] sm:$0xff] %vm557, %v1178
      %1211 = vst.msk [vmem:[%s197 + $0x50] sm:$0xff] %vm557, %v1179
      %1212 = vst.msk [vmem:[%s197 + $0x58] sm:$0xff] %vm557, %v1180
      %1213 = vst.msk [vmem:[%s197 + $0x60] sm:$0xff] %vm557, %v1181
      %1214 = vst.msk [vmem:[%s197 + $0x68] sm:$0xff] %vm557, %v1182
      %1215 = vst.msk [vmem:[%s197 + $0x70] sm:$0xff] %vm557, %v1183
      %1216 = vst.msk [vmem:[%s197 + $0x78] sm:$0xff] %vm557, %v1184
      %1217 = vst.msk [vmem:[%s197 + $0x80] sm:$0xff] %vm557, %v1185
      %1218 = vst.msk [vmem:[%s197 + $0x88] sm:$0xff] %vm557, %v1186
      %1219 = vst.msk [vmem:[%s197 + $0x90] sm:$0xff] %vm557, %v1187
      %1220 = vst.msk [vmem:[%s197 + $0x98] sm:$0xff] %vm557, %v1188
      %1221 = vst.msk [vmem:[%s197 + $0xa0] sm:$0xff] %vm557, %v1189
      %1222 = vst.msk [vmem:[%s197 + $0xa8] sm:$0xff] %vm557, %v1190
      %1223 = vst.msk [vmem:[%s197 + $0xb0] sm:$0xff] %vm557, %v1191
      %1224 = vst.msk [vmem:[%s197 + $0xb8] sm:$0xff] %vm557, %v1192
      %1225 = vst.msk [vmem:[%s197 + $0xc0] sm:$0xff] %vm557, %v1193
      %1226 = vst.msk [vmem:[%s197 + $0xc8] sm:$0xff] %vm557, %v1194
      %1227 = vst.msk [vmem:[%s197 + $0xd0] sm:$0xff] %vm557, %v1195
      %1228 = vst.msk [vmem:[%s197 + $0xd8] sm:$0xff] %vm557, %v1196
      %1229 = vst.msk [vmem:[%s197 + $0xe0] sm:$0xff] %vm557, %v1197
      %1230 = vst.msk [vmem:[%s197 + $0xe8] sm:$0xff] %vm557, %v1198
      %1231 = vst.msk [vmem:[%s197 + $0xf0] sm:$0xff] %vm557, %v1199
      %1232 = vst.msk [vmem:[%s197 + $0xf8] sm:$0xff] %vm557, %v1200
      %p1233 = scmp.lt.s32.totalorder %s15, 1
      %s1234 = scalar_select %p1233, %s15, 1
      %s1235 = smul.addr %s1234, 32
      %s1236 = smul.addr %s1235, 8
      %s1237 = scalar_lea.vmem %s4, %s1236
      // Predicated region
      $region37: #{_lambda_.1} parent=35 // pred_check
        %p1238 = pneg %p122
      $region38: #{_lambda_.1} parent=35 // pred_check_branch
        %1240 = sbr.rel (%p1238) target = $region40
      $region39: #{_lambda_.1} parent=35 // pred_region
        _
      $region40: #{_lambda_.1} parent=35 // pred_fallthru
        _
    $region36: #{_lambda_.1} parent=5 // pred_fallthru
      _
    %p1241 = scmp.le.s32.totalorder 2, %s10
    // Predicated region
    $region41: #{_lambda_.1} parent=5 // pred_check
      %p1242 = pneg %p1241
    $region42: #{_lambda_.1} parent=5 // pred_check_branch
      %1244 = sbr.rel (%p1242) target = $region44
    $region43: #{_lambda_.1} parent=5 // pred_region
      %s1245 = ssub.s32 %s10, 2
      // Predicated region
      $region45: #{_lambda_.1} parent=43 // pred_check
        %p1246 = pneg %p128
      $region46: #{_lambda_.1} parent=43 // pred_check_branch
        %1248 = sbr.rel (%p1246) target = $region48
      $region47: #{_lambda_.1} parent=43 // pred_region
        %p1249 = scmp.lt.s32.totalorder %s16, 1
        %s1250 = scalar_select %p1249, %s16, 1
        %s1251 = smul.addr %s1250, 32
        %s1252 = smul.addr %s1251, 8
        %s1253 = scalar_lea.vmem %s4, %s1252
      $region48: #{_lambda_.1} parent=43 // pred_fallthru
        _
    $region44: #{_lambda_.1} parent=5 // pred_fallthru
      _
  $region6: #{_lambda_.1} parent=0 // loop_footer
    %s14 = sadd.s32 1, %s10
  $region7: #{_lambda_.1} parent=0 // loop_footer_branch
    %9 = sbr.rel target = $region3
  $region8: #{_lambda_.1} parent=0 // loop_exit
    _

</llo_original>
